<compile_context>
chip_gen: v7x
topology: tpu7x:2x2x1
jax: 0.10.0
libtpu: 0.0.40
codegen_flags: <defaults>
</compile_context>

<pallas_src>
import numpy as np
import jax
import jax.numpy as jnp
from jax.experimental import pallas as pl
from jax.experimental.pallas import tpu as pltpu

IMAGENET_MEAN = (0.485, 0.456, 0.406)
IMAGENET_STD = (0.229, 0.224, 0.225)

PATCH_SIZE = 4      # encoder.patch_size == encoder_stride
NUM_FEATURES = 32   # encoder.num_features

# VMEM budget for the dense-Kronecker DFT kernels (fits v7x's 64 MiB physical).
_DFT_VMEM_LIMIT = 48 * 1024 * 1024


def _dot(a, b):
    return jnp.dot(a, b, preferred_element_type=jnp.float32)


# ------------------------------ Pallas kernels ------------------------------

def _transform_normalize_kernel(x_ref, m2_ref, kf_ref, kinv_ref, mean_ref,
                                isd_ref, xcn_ref, xn_ref):
    """One batch element per grid step; rows are the C channel images (C, HW).

    [Re | Im](fft2(x))  = x @ K_fwd                      (1 MXU launch)
    Re(ifft2(Y))        = [Yre | Yim] @ K_inv            (1 MXU launch, 1/HW folded)
    The (1, 2*HW) mask row already holds the ifftshift-ed mask duplicated for
    the Re/Im halves, so the chain stays in the un-shifted frequency domain
    and broadcasts across channels inside the kernel.  Normalize(IMAGENET) is
    fused and applied to both the clamped reconstruction and the clean input.
    """
    x = x_ref[...]                                       # (C, HW) f32
    s = _dot(x.astype(jnp.bfloat16), kf_ref[...])        # (C, 2HW) = [Re | Im]
    y = s * m2_ref[...]                                  # masked spectrum (f32)
    rec = _dot(y.astype(jnp.bfloat16), kinv_ref[...])    # (C, HW) Re(ifft2)
    x_cor = jnp.clip(rec, 0.0, 1.0)

    mean = mean_ref[...]                                 # (C, 1) channel mean
    isd = isd_ref[...]                                   # (C, 1) 1/std
    xcn_ref[...] = (x_cor - mean) * isd
    xn_ref[...] = (x - mean) * isd


def _matmul_bias_kernel(a_ref, w_ref, b_ref, o_ref):
    o_ref[...] = _dot(a_ref[...], w_ref[...]) + b_ref[...]


def _loss_fag_kernel(xr_ref, xt_ref, m2_ref, kf_ref, fagw_ref, fagb_ref,
                     msum_ref, usum_ref, logits_ref):
    """Per-batch frequency-loss partial sums + FAG head (one grid step / batch).

    power = |fft2(x_rec - x_target)|^2; with the concatenated [Re | Im] layout
    the masked / total sums are plain reductions over (C, 2HW) (the Re^2 and
    Im^2 halves add up to the power).  Weighting by the ifftshift-ed mask
    equals weighting the fftshift-ed spectrum by the original mask (the sum is
    permutation invariant).  FAG head: global average pool + linear (sublane
    reduce -- no selector matmul, no reshapes).
    """
    xr = xr_ref[...]                                     # (C, HW) f32
    d = xr - xt_ref[...]
    dd = _dot(d.astype(jnp.bfloat16), kf_ref[...])       # (C, 2HW) = [Re | Im]
    p2 = dd * dd                                         # squared halves
    pm = jnp.sum(p2 * m2_ref[...], axis=1, keepdims=True)   # (C, 1) masked power
    pt = jnp.sum(p2, axis=1, keepdims=True)                 # (C, 1) total power
    msum_ref[...] = jnp.sum(pm, axis=0, keepdims=True)           # (1, 1)
    usum_ref[...] = jnp.sum(pt - pm, axis=0, keepdims=True)      # (1, 1)

    pooled = jnp.mean(xr, axis=1, keepdims=True)         # (C, 1) global avg pool
    logits_ref[...] = (jnp.sum(pooled * fagw_ref[...], axis=0, keepdims=True)
                       + fagb_ref[...])                  # (1, 2)


# ------------------------------ kernel wrappers ------------------------------

def freq_transform_normalize(x_rows, m2, k_fwd, k_inv, mean_col, inv_std_col):
    B, C, HW = x_rows.shape
    return pl.pallas_call(
        _transform_normalize_kernel,
        out_shape=(jax.ShapeDtypeStruct((B, C, HW), jnp.float32),
                   jax.ShapeDtypeStruct((B, C, HW), jnp.float32)),
        grid=(B,),
        in_specs=(
            pl.BlockSpec((None, C, HW), lambda b: (b, 0, 0)),
            pl.BlockSpec((None, 1, 2 * HW), lambda b: (b, 0, 0)),
            pl.BlockSpec((HW, 2 * HW), lambda b: (0, 0)),
            pl.BlockSpec((2 * HW, HW), lambda b: (0, 0)),
            pl.BlockSpec((C, 1), lambda b: (0, 0)),
            pl.BlockSpec((C, 1), lambda b: (0, 0)),
        ),
        out_specs=(
            pl.BlockSpec((None, C, HW), lambda b: (b, 0, 0)),
            pl.BlockSpec((None, C, HW), lambda b: (b, 0, 0)),
        ),
        compiler_params=pltpu.CompilerParams(
            dimension_semantics=("parallel",),
            vmem_limit_bytes=_DFT_VMEM_LIMIT),
    )(x_rows, m2, k_fwd, k_inv, mean_col, inv_std_col)


def matmul_bias(a, w, bias, tm=128):
    M, K = a.shape
    _, N = w.shape
    tm = min(tm, M)                      # token tiling kicks in at larger M
    return pl.pallas_call(
        _matmul_bias_kernel,
        out_shape=jax.ShapeDtypeStruct((M, N), jnp.float32),
        grid=(pl.cdiv(M, tm),),
        in_specs=[
            pl.BlockSpec((tm, K), lambda i: (i, 0)),
            pl.BlockSpec((K, N), lambda i: (0, 0)),
            pl.BlockSpec((1, N), lambda i: (0, 0)),
        ],
        out_specs=pl.BlockSpec((tm, N), lambda i: (i, 0)),
        compiler_params=pltpu.CompilerParams(
            dimension_semantics=("parallel",)),
    )(a, w, bias)


def loss_and_fag(x_rec, x_tgt, m2, k_fwd, fag_w, fag_b):
    B, C, HW = x_rec.shape
    return pl.pallas_call(
        _loss_fag_kernel,
        out_shape=(jax.ShapeDtypeStruct((B, 1, 1), jnp.float32),
                   jax.ShapeDtypeStruct((B, 1, 1), jnp.float32),
                   jax.ShapeDtypeStruct((B, 1, 2), jnp.float32)),
        grid=(B,),
        in_specs=(
            pl.BlockSpec((None, C, HW), lambda b: (b, 0, 0)),
            pl.BlockSpec((None, C, HW), lambda b: (b, 0, 0)),
            pl.BlockSpec((None, 1, 2 * HW), lambda b: (b, 0, 0)),
            pl.BlockSpec((HW, 2 * HW), lambda b: (0, 0)),
            pl.BlockSpec((C, 2), lambda b: (0, 0)),
            pl.BlockSpec((1, 2), lambda b: (0, 0)),
        ),
        out_specs=(
            pl.BlockSpec((None, 1, 1), lambda b: (b, 0, 0)),
            pl.BlockSpec((None, 1, 1), lambda b: (b, 0, 0)),
            pl.BlockSpec((None, 1, 2), lambda b: (b, 0, 0)),
        ),
        compiler_params=pltpu.CompilerParams(
            dimension_semantics=("parallel",),
            vmem_limit_bytes=_DFT_VMEM_LIMIT),
    )(x_rec, x_tgt, m2, k_fwd, fag_w, fag_b)


# --------------------------------- params -----------------------------------

def init_params(H, W, C):
    assert H == W, "DFT matrix shared across both spatial axes"
    assert C == len(IMAGENET_MEAN)
    HW = H * W
    # Dense-Kronecker VMEM size guard (K_fwd + K_inv in bf16).
    kron_bytes = 2 * (HW * 2 * HW) * 2
    assert kron_bytes <= 32 * 1024 * 1024, (
        "dense Kronecker DFT constants exceed the VMEM budget")
    # TODO(synk): for larger H switch to the factored (separable) row/column
    # DFT (or lane-tile K's output columns with a pipelined grid).

    key = jax.random.PRNGKey(0)
    k1, k2, k3 = jax.random.split(key, 3)
    p = PATCH_SIZE

    # Kronecker DFT matrix: fft2(x).flatten() == x.flatten() @ kron(F, F)
    n = np.arange(H)
    Fc = np.exp((-2j * np.pi / H) * np.outer(n, n))
    K = np.kron(Fc, Fc)                                   # (HW, HW) complex
    kr = np.real(K).astype(np.float32)
    ki = np.imag(K).astype(np.float32)
    # Fused forward / inverse DFT constants (2 MXU launches per image instead
    # of 4); inverse has the 1/HW normalization folded in.  Stored bf16.
    k_fwd = np.concatenate([kr, ki], axis=1)                    # (HW, 2HW)
    k_inv = np.concatenate([kr, ki], axis=0) * (1.0 / HW)       # (2HW, HW)

    enc_w = 0.02 * jax.random.normal(k1, (2 * C * p * p, NUM_FEATURES), jnp.float32)
    enc_b = jnp.zeros((1, NUM_FEATURES), jnp.float32)
    dec_w = 0.02 * jax.random.normal(k2, (NUM_FEATURES, p * p * C), jnp.float32)
    dec_b = jnp.zeros((1, p * p * C), jnp.float32)

    # encoder -> decoder composition is exactly affine: fuse into one GEMM,
    # then zero-pad the output feature dim to 128 lanes (unmasked vst).
    w_comb = enc_w @ dec_w                                      # (2*C*p*p, p*p*C)
    b_comb = enc_b @ dec_w + dec_b                              # (1, p*p*C)
    out_pad = 128
    w_pad = jnp.zeros((2 * C * p * p, out_pad), jnp.float32).at[:, :p * p * C].set(w_comb)
    b_pad = jnp.zeros((1, out_pad), jnp.float32).at[:, :p * p * C].set(b_comb)

    return dict(
        k_fwd=jnp.asarray(k_fwd, jnp.bfloat16),
        k_inv=jnp.asarray(k_inv, jnp.bfloat16),
        mean_col=jnp.array(IMAGENET_MEAN, jnp.float32).reshape(C, 1),
        inv_std_col=(1.0 / jnp.array(IMAGENET_STD, jnp.float32)).reshape(C, 1),
        encdec_w=w_pad,
        encdec_b=b_pad,
        fag_w=0.1 * jax.random.normal(k3, (C, 2), jnp.float32),
        fag_b=jnp.zeros((1, 2), jnp.float32),
    )


# --------------------------------- forward ----------------------------------

def mfm_mask_forward(params, x, x_target, mask, label):
    B, C, H, W = x.shape
    p = PATCH_SIZE
    HW = H * W
    k_fwd, k_inv = params["k_fwd"], params["k_inv"]

    # ---- mask.unsqueeze(1); ifftshift folded via roll; one (1, 2*HW) row per
    #      batch (duplicated for the Re/Im halves) -- channel broadcast happens
    #      inside the kernels, not on the host ----
    mask1 = mask[:, None, :, :].astype(jnp.float32)                   # (B,1,H,W)
    mask_eff = jnp.roll(mask1, shift=(-(H // 2), -(W // 2)), axis=(-2, -1))
    m_row = mask_eff.reshape(B, 1, HW)
    m2 = jnp.concatenate([m_row, m_row], axis=-1)                     # (B,1,2HW)

    # ---- frequency_transform + normalize_img(x_corrupted), normalize_img(x),
    #      fused; grid over batch, "parallel" for v7x megacore ----
    x_rows = x.reshape(B, C, HW)
    xcn, xn = freq_transform_normalize(
        x_rows, m2, k_fwd, k_inv, params["mean_col"], params["inv_std_col"])

    # ---- encoder+decoder as ONE fused GEMM (enc/dec are both affine) ----
    # TODO(synk): patchify / pixel-shuffle 6-D transposes stay in XLA glue; at
    # real resolutions express them with strided/Element BlockSpecs instead.
    hp, wp = H // p, W // p
    x_cat = jnp.concatenate([xn.reshape(B, C, H, W),
                             xcn.reshape(B, C, H, W)], axis=1)        # (B,2C,H,W)
    patches = x_cat.reshape(B, 2 * C, hp, p, wp, p)
    patches = patches.transpose(0, 2, 4, 1, 3, 5).reshape(B * hp * wp, 2 * C * p * p)
    dec = matmul_bias(patches, params["encdec_w"], params["encdec_b"])
    dec = dec[:, :p * p * C]                                          # drop lane padding
    dec = dec.reshape(B, hp, wp, C, p, p).transpose(0, 3, 1, 4, 2, 5)
    x_rec = dec.reshape(B, C, HW)

    # ---- FrequencyLoss masked/unmasked partial sums + FAG head, one kernel ----
    xt_rows = x_target.reshape(B, C, HW)
    msum_b, usum_b, logits_b = loss_and_fag(
        x_rec, xt_rows, m2, k_fwd, params["fag_w"], params["fag_b"])
    msum = jnp.sum(msum_b)
    usum = jnp.sum(usum_b)
    logits = logits_b.reshape(B, 2)

    in_chans = float(C)
    num_patches = 1.0                    # loss_recon.shape[1] (patch_factor == 1)
    loss = (2.0 * usum / jnp.sum(1.0 - mask1) / in_chans / num_patches
            + msum / jnp.sum(mask1) / in_chans / num_patches)

    # ---- weighted CrossEntropyLoss(weight=[4, 1]) on FAG logits ----
    # TODO(synk): tiny scalar cross-entropy reduction kept in plain JAX glue.
    logz = logits - jax.scipy.special.logsumexp(logits, axis=-1, keepdims=True)
    nll = -jnp.take_along_axis(logz, label[:, None], axis=-1)[:, 0]
    ce_w = jnp.array([4.0, 1.0], jnp.float32)[label]
    loss_fag = jnp.sum(ce_w * nll) / jnp.sum(ce_w)

    loss = loss + 0.2 * loss_fag
    return loss, loss_fag


if __name__ == "__main__":
    B, C, H, W = 2, 3, 16, 16
    key = jax.random.PRNGKey(0)
    kx, kt = jax.random.split(key, 2)
    x = jax.random.uniform(kx, (B, C, H, W), jnp.float32)
    x_target = jax.random.uniform(kt, (B, C, H, W), jnp.float32)

    # low-pass "keep" mask in the fftshift-ed frequency domain (radius = 4)
    yy, xx = jnp.meshgrid(jnp.arange(H), jnp.arange(W), indexing="ij")
    r2 = (yy - H // 2) ** 2 + (xx - W // 2) ** 2
    mask = jnp.tile((r2 <= 16).astype(jnp.float32)[None], (B, 1, 1))   # (B, H, W)
    label = jnp.array([0, 1], jnp.int32)

    params = init_params(H, W, C)
    loss, loss_fag = jax.jit(mfm_mask_forward)(params, x, x_target, mask, label)
    jax.block_until_ready((loss, loss_fag))
    print("KERNEL_OK")
</pallas_src>

<mosaic_0001>
module attributes {stable_mosaic.version = 11 : i64} {
  func.func @_transform_normalize_kernel(%arg0: i32, %arg1: memref<1x3x256xf32, #tpu.memory_space<vmem>>, %arg2: memref<1x1x512xf32, #tpu.memory_space<vmem>>, %arg3: memref<256x512xbf16, #tpu.memory_space<vmem>>, %arg4: memref<512x256xbf16, #tpu.memory_space<vmem>>, %arg5: memref<3x1xf32, #tpu.memory_space<vmem>>, %arg6: memref<3x1xf32, #tpu.memory_space<vmem>>, %arg7: memref<1x3x256xf32, #tpu.memory_space<vmem>>, %arg8: memref<1x3x256xf32, #tpu.memory_space<vmem>>) attributes {dimension_semantics = [#tpu.dimension_semantics<parallel>], iteration_bounds = array<i64: 2>, scalar_prefetch = 0 : i64, scratch_operands = 0 : i64, tpu.core_type = #tpu.core_type<tc>, window_params = [{transform_indices = @transform_0, window_bounds = array<i64: 1, 3, 256>}, {transform_indices = @transform_1, window_bounds = array<i64: 1, 1, 512>}, {pipeline_mode = #tpu.pipeline_mode<synchronous>, transform_indices = @transform_2, window_bounds = array<i64: 256, 512>}, {pipeline_mode = #tpu.pipeline_mode<synchronous>, transform_indices = @transform_3, window_bounds = array<i64: 512, 256>}, {pipeline_mode = #tpu.pipeline_mode<synchronous>, transform_indices = @transform_4, window_bounds = array<i64: 3, 1>}, {pipeline_mode = #tpu.pipeline_mode<synchronous>, transform_indices = @transform_5, window_bounds = array<i64: 3, 1>}, {transform_indices = @transform_6, window_bounds = array<i64: 1, 3, 256>}, {transform_indices = @transform_7, window_bounds = array<i64: 1, 3, 256>}]} {
    %c0 = arith.constant 0 : index
    %c0_0 = arith.constant 0 : index
    %c0_1 = arith.constant 0 : index
    %0 = vector.load %arg1[%c0, %c0_0, %c0_1] : memref<1x3x256xf32, #tpu.memory_space<vmem>>, vector<1x3x256xf32>
    %1 = vector.shape_cast %0 : vector<1x3x256xf32> to vector<3x256xf32>
    %2 = arith.truncf %1 : vector<3x256xf32> to vector<3x256xbf16>
    %c0_2 = arith.constant 0 : index
    %c0_3 = arith.constant 0 : index
    %3 = vector.load %arg3[%c0_2, %c0_3] : memref<256x512xbf16, #tpu.memory_space<vmem>>, vector<256x512xbf16>
    %cst = arith.constant dense<0.000000e+00> : vector<3x512xf32>
    %4 = tpu.matmul %2, %3, %cst {dimension_numbers = #tpu.dot_dimension_numbers<[1], [0], [0], [1], [0, 0, 1, 1], [], []>} : vector<3x256xbf16>, vector<256x512xbf16>, vector<3x512xf32> -> vector<3x512xf32>
    %c0_4 = arith.constant 0 : index
    %c0_5 = arith.constant 0 : index
    %c0_6 = arith.constant 0 : index
    %5 = vector.load %arg2[%c0_4, %c0_5, %c0_6] : memref<1x1x512xf32, #tpu.memory_space<vmem>>, vector<1x1x512xf32>
    %6 = vector.shape_cast %5 : vector<1x1x512xf32> to vector<1x512xf32>
    %7 = vector.broadcast %6 : vector<1x512xf32> to vector<3x512xf32>
    %8 = arith.mulf %4, %7 : vector<3x512xf32>
    %9 = arith.truncf %8 : vector<3x512xf32> to vector<3x512xbf16>
    %c0_7 = arith.constant 0 : index
    %c0_8 = arith.constant 0 : index
    %10 = vector.load %arg4[%c0_7, %c0_8] : memref<512x256xbf16, #tpu.memory_space<vmem>>, vector<512x256xbf16>
    %cst_9 = arith.constant dense<0.000000e+00> : vector<3x256xf32>
    %11 = tpu.matmul %9, %10, %cst_9 {dimension_numbers = #tpu.dot_dimension_numbers<[1], [0], [0], [1], [0, 0, 1, 1], [], []>} : vector<3x512xbf16>, vector<512x256xbf16>, vector<3x256xf32> -> vector<3x256xf32>
    %cst_10 = arith.constant 0.000000e+00 : f32
    %cst_11 = arith.constant 1.000000e+00 : f32
    %12 = vector.broadcast %cst_10 : f32 to vector<3x256xf32>
    %13 = arith.maximumf %12, %11 : vector<3x256xf32>
    %14 = vector.broadcast %cst_11 : f32 to vector<3x256xf32>
    %15 = arith.minimumf %14, %13 : vector<3x256xf32>
    %c0_12 = arith.constant 0 : index
    %c0_13 = arith.constant 0 : index
    %16 = vector.load %arg5[%c0_12, %c0_13] : memref<3x1xf32, #tpu.memory_space<vmem>>, vector<3x1xf32>
    %c0_14 = arith.constant 0 : index
    %c0_15 = arith.constant 0 : index
    %17 = vector.load %arg6[%c0_14, %c0_15] : memref<3x1xf32, #tpu.memory_space<vmem>>, vector<3x1xf32>
    %18 = vector.broadcast %16 : vector<3x1xf32> to vector<3x256xf32>
    %19 = arith.subf %15, %18 : vector<3x256xf32>
    %20 = vector.broadcast %17 : vector<3x1xf32> to vector<3x256xf32>
    %21 = arith.mulf %19, %20 : vector<3x256xf32>
    %c0_16 = arith.constant 0 : index
    %c0_17 = arith.constant 0 : index
    %c0_18 = arith.constant 0 : index
    %22 = vector.load %arg7[%c0_16, %c0_17, %c0_18] : memref<1x3x256xf32, #tpu.memory_space<vmem>>, vector<1x3x256xf32>
    %23 = vector.shape_cast %22 : vector<1x3x256xf32> to vector<3x256xf32>
    %24 = vector.shape_cast %21 : vector<3x256xf32> to vector<1x3x256xf32>
    tpu.vector_store %arg7[%c0_16, %c0_17, %c0_18], %24 {strides = array<i32>} : memref<1x3x256xf32, #tpu.memory_space<vmem>>, vector<1x3x256xf32>,
    %25 = vector.broadcast %16 : vector<3x1xf32> to vector<3x256xf32>
    %26 = arith.subf %1, %25 : vector<3x256xf32>
    %27 = vector.broadcast %17 : vector<3x1xf32> to vector<3x256xf32>
    %28 = arith.mulf %26, %27 : vector<3x256xf32>
    %c0_19 = arith.constant 0 : index
    %c0_20 = arith.constant 0 : index
    %c0_21 = arith.constant 0 : index
    %29 = vector.load %arg8[%c0_19, %c0_20, %c0_21] : memref<1x3x256xf32, #tpu.memory_space<vmem>>, vector<1x3x256xf32>
    %30 = vector.shape_cast %29 : vector<1x3x256xf32> to vector<3x256xf32>
    %31 = vector.shape_cast %28 : vector<3x256xf32> to vector<1x3x256xf32>
    tpu.vector_store %arg8[%c0_19, %c0_20, %c0_21], %31 {strides = array<i32>} : memref<1x3x256xf32, #tpu.memory_space<vmem>>, vector<1x3x256xf32>,
    return
  }
  func.func @transform_0(%arg0: i32) -> (i32, i32, i32) {
    %c0_i32 = arith.constant 0 : i32
    %c0_i32_0 = arith.constant 0 : i32
    %c0_i32_1 = arith.constant 0 : i32
    return %arg0, %c0_i32, %c0_i32_0 : i32, i32, i32
  }
  func.func @transform_1(%arg0: i32) -> (i32, i32, i32) {
    %c0_i32 = arith.constant 0 : i32
    %c0_i32_0 = arith.constant 0 : i32
    %c0_i32_1 = arith.constant 0 : i32
    return %arg0, %c0_i32, %c0_i32_0 : i32, i32, i32
  }
  func.func @transform_2(%arg0: i32) -> (i32, i32) {
    %c0_i32 = arith.constant 0 : i32
    %c0_i32_0 = arith.constant 0 : i32
    %c0_i32_1 = arith.constant 0 : i32
    return %c0_i32, %c0_i32_0 : i32, i32
  }
  func.func @transform_3(%arg0: i32) -> (i32, i32) {
    %c0_i32 = arith.constant 0 : i32
    %c0_i32_0 = arith.constant 0 : i32
    %c0_i32_1 = arith.constant 0 : i32
    return %c0_i32, %c0_i32_0 : i32, i32
  }
  func.func @transform_4(%arg0: i32) -> (i32, i32) {
    %c0_i32 = arith.constant 0 : i32
    %c0_i32_0 = arith.constant 0 : i32
    %c0_i32_1 = arith.constant 0 : i32
    return %c0_i32, %c0_i32_0 : i32, i32
  }
  func.func @transform_5(%arg0: i32) -> (i32, i32) {
    %c0_i32 = arith.constant 0 : i32
    %c0_i32_0 = arith.constant 0 : i32
    %c0_i32_1 = arith.constant 0 : i32
    return %c0_i32, %c0_i32_0 : i32, i32
  }
  func.func @transform_6(%arg0: i32) -> (i32, i32, i32) {
    %c0_i32 = arith.constant 0 : i32
    %c0_i32_0 = arith.constant 0 : i32
    %c0_i32_1 = arith.constant 0 : i32
    return %arg0, %c0_i32, %c0_i32_0 : i32, i32, i32
  }
  func.func @transform_7(%arg0: i32) -> (i32, i32, i32) {
    %c0_i32 = arith.constant 0 : i32
    %c0_i32_0 = arith.constant 0 : i32
    %c0_i32_1 = arith.constant 0 : i32
    return %arg0, %c0_i32, %c0_i32_0 : i32, i32, i32
  }
}

module attributes {stable_mosaic.version = 11 : i64} {
  func.func @_matmul_bias_kernel(%arg0: i32, %arg1: memref<32x96xf32, #tpu.memory_space<vmem>>, %arg2: memref<96x128xf32, #tpu.memory_space<vmem>>, %arg3: memref<1x128xf32, #tpu.memory_space<vmem>>, %arg4: memref<32x128xf32, #tpu.memory_space<vmem>>) attributes {dimension_semantics = [#tpu.dimension_semantics<parallel>], iteration_bounds = array<i64: 1>, scalar_prefetch = 0 : i64, scratch_operands = 0 : i64, tpu.core_type = #tpu.core_type<tc>, window_params = [{transform_indices = @transform_0, window_bounds = array<i64: 32, 96>}, {pipeline_mode = #tpu.pipeline_mode<synchronous>, transform_indices = @transform_1, window_bounds = array<i64: 96, 128>}, {pipeline_mode = #tpu.pipeline_mode<synchronous>, transform_indices = @transform_2, window_bounds = array<i64: 1, 128>}, {transform_indices = @transform_3, window_bounds = array<i64: 32, 128>}]} {
    %c0 = arith.constant 0 : index
    %c0_0 = arith.constant 0 : index
    %0 = vector.load %arg1[%c0, %c0_0] : memref<32x96xf32, #tpu.memory_space<vmem>>, vector<32x96xf32>
    %c0_1 = arith.constant 0 : index
    %c0_2 = arith.constant 0 : index
    %1 = vector.load %arg2[%c0_1, %c0_2] : memref<96x128xf32, #tpu.memory_space<vmem>>, vector<96x128xf32>
    %cst = arith.constant dense<0.000000e+00> : vector<32x128xf32>
    %2 = tpu.matmul %0, %1, %cst {dimension_numbers = #tpu.dot_dimension_numbers<[1], [0], [0], [1], [0, 0, 1, 1], [], []>} : vector<32x96xf32>, vector<96x128xf32>, vector<32x128xf32> -> vector<32x128xf32>
    %c0_3 = arith.constant 0 : index
    %c0_4 = arith.constant 0 : index
    %3 = vector.load %arg3[%c0_3, %c0_4] : memref<1x128xf32, #tpu.memory_space<vmem>>, vector<1x128xf32>
    %4 = vector.broadcast %3 : vector<1x128xf32> to vector<32x128xf32>
    %5 = arith.addf %2, %4 : vector<32x128xf32>
    %c0_5 = arith.constant 0 : index
    %c0_6 = arith.constant 0 : index
    %6 = vector.load %arg4[%c0_5, %c0_6] : memref<32x128xf32, #tpu.memory_space<vmem>>, vector<32x128xf32>
    tpu.vector_store %arg4[%c0_5, %c0_6], %5 {strides = array<i32>} : memref<32x128xf32, #tpu.memory_space<vmem>>, vector<32x128xf32>,
    return
  }
  func.func @transform_0(%arg0: i32) -> (i32, i32) {
    %c0_i32 = arith.constant 0 : i32
    %c0_i32_0 = arith.constant 0 : i32
    return %arg0, %c0_i32 : i32, i32
  }
  func.func @transform_1(%arg0: i32) -> (i32, i32) {
    %c0_i32 = arith.constant 0 : i32
    %c0_i32_0 = arith.constant 0 : i32
    %c0_i32_1 = arith.constant 0 : i32
    return %c0_i32, %c0_i32_0 : i32, i32
  }
  func.func @transform_2(%arg0: i32) -> (i32, i32) {
    %c0_i32 = arith.constant 0 : i32
    %c0_i32_0 = arith.constant 0 : i32
    %c0_i32_1 = arith.constant 0 : i32
    return %c0_i32, %c0_i32_0 : i32, i32
  }
  func.func @transform_3(%arg0: i32) -> (i32, i32) {
    %c0_i32 = arith.constant 0 : i32
    %c0_i32_0 = arith.constant 0 : i32
    return %arg0, %c0_i32 : i32, i32
  }
}

module attributes {stable_mosaic.version = 11 : i64} {
  func.func @_loss_fag_kernel(%arg0: i32, %arg1: memref<1x3x256xf32, #tpu.memory_space<vmem>>, %arg2: memref<1x3x256xf32, #tpu.memory_space<vmem>>, %arg3: memref<1x1x512xf32, #tpu.memory_space<vmem>>, %arg4: memref<256x512xbf16, #tpu.memory_space<vmem>>, %arg5: memref<3x2xf32, #tpu.memory_space<vmem>>, %arg6: memref<1x2xf32, #tpu.memory_space<vmem>>, %arg7: memref<1x1x1xf32, #tpu.memory_space<vmem>>, %arg8: memref<1x1x1xf32, #tpu.memory_space<vmem>>, %arg9: memref<1x1x2xf32, #tpu.memory_space<vmem>>) attributes {dimension_semantics = [#tpu.dimension_semantics<parallel>], iteration_bounds = array<i64: 2>, scalar_prefetch = 0 : i64, scratch_operands = 0 : i64, tpu.core_type = #tpu.core_type<tc>, window_params = [{transform_indices = @transform_0, window_bounds = array<i64: 1, 3, 256>}, {transform_indices = @transform_1, window_bounds = array<i64: 1, 3, 256>}, {transform_indices = @transform_2, window_bounds = array<i64: 1, 1, 512>}, {pipeline_mode = #tpu.pipeline_mode<synchronous>, transform_indices = @transform_3, window_bounds = array<i64: 256, 512>}, {pipeline_mode = #tpu.pipeline_mode<synchronous>, transform_indices = @transform_4, window_bounds = array<i64: 3, 2>}, {pipeline_mode = #tpu.pipeline_mode<synchronous>, transform_indices = @transform_5, window_bounds = array<i64: 1, 2>}, {transform_indices = @transform_6, window_bounds = array<i64: 1, 1, 1>}, {transform_indices = @transform_7, window_bounds = array<i64: 1, 1, 1>}, {transform_indices = @transform_8, window_bounds = array<i64: 1, 1, 2>}]} {
    %c0 = arith.constant 0 : index
    %c0_0 = arith.constant 0 : index
    %c0_1 = arith.constant 0 : index
    %0 = vector.load %arg1[%c0, %c0_0, %c0_1] : memref<1x3x256xf32, #tpu.memory_space<vmem>>, vector<1x3x256xf32>
    %1 = vector.shape_cast %0 : vector<1x3x256xf32> to vector<3x256xf32>
    %c0_2 = arith.constant 0 : index
    %c0_3 = arith.constant 0 : index
    %c0_4 = arith.constant 0 : index
    %2 = vector.load %arg2[%c0_2, %c0_3, %c0_4] : memref<1x3x256xf32, #tpu.memory_space<vmem>>, vector<1x3x256xf32>
    %3 = vector.shape_cast %2 : vector<1x3x256xf32> to vector<3x256xf32>
    %4 = arith.subf %1, %3 : vector<3x256xf32>
    %5 = arith.truncf %4 : vector<3x256xf32> to vector<3x256xbf16>
    %c0_5 = arith.constant 0 : index
    %c0_6 = arith.constant 0 : index
    %6 = vector.load %arg4[%c0_5, %c0_6] : memref<256x512xbf16, #tpu.memory_space<vmem>>, vector<256x512xbf16>
    %cst = arith.constant dense<0.000000e+00> : vector<3x512xf32>
    %7 = tpu.matmul %5, %6, %cst {dimension_numbers = #tpu.dot_dimension_numbers<[1], [0], [0], [1], [0, 0, 1, 1], [], []>} : vector<3x256xbf16>, vector<256x512xbf16>, vector<3x512xf32> -> vector<3x512xf32>
    %8 = arith.mulf %7, %7 : vector<3x512xf32>
    %c0_7 = arith.constant 0 : index
    %c0_8 = arith.constant 0 : index
    %c0_9 = arith.constant 0 : index
    %9 = vector.load %arg3[%c0_7, %c0_8, %c0_9] : memref<1x1x512xf32, #tpu.memory_space<vmem>>, vector<1x1x512xf32>
    %10 = vector.shape_cast %9 : vector<1x1x512xf32> to vector<1x512xf32>
    %11 = vector.broadcast %10 : vector<1x512xf32> to vector<3x512xf32>
    %12 = arith.mulf %8, %11 : vector<3x512xf32>
    %cst_10 = arith.constant dense<0.000000e+00> : vector<3xf32>
    %13 = vector.multi_reduction <add>, %12, %cst_10 [1] : vector<3x512xf32> to vector<3xf32>
    %14 = vector.shape_cast %13 : vector<3xf32> to vector<3x1xf32>
    %cst_11 = arith.constant dense<0.000000e+00> : vector<3xf32>
    %15 = vector.multi_reduction <add>, %8, %cst_11 [1] : vector<3x512xf32> to vector<3xf32>
    %16 = vector.shape_cast %15 : vector<3xf32> to vector<3x1xf32>
    %cst_12 = arith.constant dense<0.000000e+00> : vector<1xf32>
    %17 = vector.multi_reduction <add>, %14, %cst_12 [0] : vector<3x1xf32> to vector<1xf32>
    %18 = vector.shape_cast %17 : vector<1xf32> to vector<1x1xf32>
    %c0_13 = arith.constant 0 : index
    %c0_14 = arith.constant 0 : index
    %c0_15 = arith.constant 0 : index
    %19 = vector.load %arg7[%c0_13, %c0_14, %c0_15] : memref<1x1x1xf32, #tpu.memory_space<vmem>>, vector<1x1x1xf32>
    %20 = vector.shape_cast %19 : vector<1x1x1xf32> to vector<1x1xf32>
    %21 = vector.shape_cast %18 : vector<1x1xf32> to vector<1x1x1xf32>
    tpu.vector_store %arg7[%c0_13, %c0_14, %c0_15], %21 {strides = array<i32>} : memref<1x1x1xf32, #tpu.memory_space<vmem>>, vector<1x1x1xf32>,
    %22 = arith.subf %16, %14 : vector<3x1xf32>
    %cst_16 = arith.constant dense<0.000000e+00> : vector<1xf32>
    %23 = vector.multi_reduction <add>, %22, %cst_16 [0] : vector<3x1xf32> to vector<1xf32>
    %24 = vector.shape_cast %23 : vector<1xf32> to vector<1x1xf32>
    %c0_17 = arith.constant 0 : index
    %c0_18 = arith.constant 0 : index
    %c0_19 = arith.constant 0 : index
    %25 = vector.load %arg8[%c0_17, %c0_18, %c0_19] : memref<1x1x1xf32, #tpu.memory_space<vmem>>, vector<1x1x1xf32>
    %26 = vector.shape_cast %25 : vector<1x1x1xf32> to vector<1x1xf32>
    %27 = vector.shape_cast %24 : vector<1x1xf32> to vector<1x1x1xf32>
    tpu.vector_store %arg8[%c0_17, %c0_18, %c0_19], %27 {strides = array<i32>} : memref<1x1x1xf32, #tpu.memory_space<vmem>>, vector<1x1x1xf32>,
    %cst_20 = arith.constant dense<0.000000e+00> : vector<3xf32>
    %28 = vector.multi_reduction <add>, %1, %cst_20 [1] : vector<3x256xf32> to vector<3xf32>
    %29 = vector.shape_cast %28 : vector<3xf32> to vector<3x1xf32>
    %cst_21 = arith.constant 2.560000e+02 : f32
    %30 = vector.broadcast %cst_21 : f32 to vector<3x1xf32>
    %31 = arith.divf %29, %30 : vector<3x1xf32>
    %c0_22 = arith.constant 0 : index
    %c0_23 = arith.constant 0 : index
    %32 = vector.load %arg5[%c0_22, %c0_23] : memref<3x2xf32, #tpu.memory_space<vmem>>, vector<3x2xf32>
    %33 = vector.broadcast %31 : vector<3x1xf32> to vector<3x2xf32>
    %34 = arith.mulf %33, %32 : vector<3x2xf32>
    %cst_24 = arith.constant dense<0.000000e+00> : vector<2xf32>
    %35 = vector.multi_reduction <add>, %34, %cst_24 [0] : vector<3x2xf32> to vector<2xf32>
    %36 = vector.shape_cast %35 : vector<2xf32> to vector<1x2xf32>
    %c0_25 = arith.constant 0 : index
    %c0_26 = arith.constant 0 : index
    %37 = vector.load %arg6[%c0_25, %c0_26] : memref<1x2xf32, #tpu.memory_space<vmem>>, vector<1x2xf32>
    %38 = arith.addf %36, %37 : vector<1x2xf32>
    %c0_27 = arith.constant 0 : index
    %c0_28 = arith.constant 0 : index
    %c0_29 = arith.constant 0 : index
    %39 = vector.load %arg9[%c0_27, %c0_28, %c0_29] : memref<1x1x2xf32, #tpu.memory_space<vmem>>, vector<1x1x2xf32>
    %40 = vector.shape_cast %39 : vector<1x1x2xf32> to vector<1x2xf32>
    %41 = vector.shape_cast %38 : vector<1x2xf32> to vector<1x1x2xf32>
    tpu.vector_store %arg9[%c0_27, %c0_28, %c0_29], %41 {strides = array<i32>} : memref<1x1x2xf32, #tpu.memory_space<vmem>>, vector<1x1x2xf32>,
    return
  }
  func.func @transform_0(%arg0: i32) -> (i32, i32, i32) {
    %c0_i32 = arith.constant 0 : i32
    %c0_i32_0 = arith.constant 0 : i32
    %c0_i32_1 = arith.constant 0 : i32
    return %arg0, %c0_i32, %c0_i32_0 : i32, i32, i32
  }
  func.func @transform_1(%arg0: i32) -> (i32, i32, i32) {
    %c0_i32 = arith.constant 0 : i32
    %c0_i32_0 = arith.constant 0 : i32
    %c0_i32_1 = arith.constant 0 : i32
    return %arg0, %c0_i32, %c0_i32_0 : i32, i32, i32
  }
  func.func @transform_2(%arg0: i32) -> (i32, i32, i32) {
    %c0_i32 = arith.constant 0 : i32
    %c0_i32_0 = arith.constant 0 : i32
    %c0_i32_1 = arith.constant 0 : i32
    return %arg0, %c0_i32, %c0_i32_0 : i32, i32, i32
  }
  func.func @transform_3(%arg0: i32) -> (i32, i32) {
    %c0_i32 = arith.constant 0 : i32
    %c0_i32_0 = arith.constant 0 : i32
    %c0_i32_1 = arith.constant 0 : i32
    return %c0_i32, %c0_i32_0 : i32, i32
  }
  func.func @transform_4(%arg0: i32) -> (i32, i32) {
    %c0_i32 = arith.constant 0 : i32
    %c0_i32_0 = arith.constant 0 : i32
    %c0_i32_1 = arith.constant 0 : i32
    return %c0_i32, %c0_i32_0 : i32, i32
  }
  func.func @transform_5(%arg0: i32) -> (i32, i32) {
    %c0_i32 = arith.constant 0 : i32
    %c0_i32_0 = arith.constant 0 : i32
    %c0_i32_1 = arith.constant 0 : i32
    return %c0_i32, %c0_i32_0 : i32, i32
  }
  func.func @transform_6(%arg0: i32) -> (i32, i32, i32) {
    %c0_i32 = arith.constant 0 : i32
    %c0_i32_0 = arith.constant 0 : i32
    %c0_i32_1 = arith.constant 0 : i32
    return %arg0, %c0_i32, %c0_i32_0 : i32, i32, i32
  }
  func.func @transform_7(%arg0: i32) -> (i32, i32, i32) {
    %c0_i32 = arith.constant 0 : i32
    %c0_i32_0 = arith.constant 0 : i32
    %c0_i32_1 = arith.constant 0 : i32
    return %arg0, %c0_i32, %c0_i32_0 : i32, i32, i32
  }
  func.func @transform_8(%arg0: i32) -> (i32, i32, i32) {
    %c0_i32 = arith.constant 0 : i32
    %c0_i32_0 = arith.constant 0 : i32
    %c0_i32_1 = arith.constant 0 : i32
    return %arg0, %c0_i32, %c0_i32_0 : i32, i32, i32
  }
}

</mosaic_0001>

<llo_original>
// kernel: mfm_mask_forward.4
$region0: #{mfm_mask_forward.4}
  #allocation0 [shape = 'u32[]', space=smem, size = 0x4, offset = 0x4, fixed_abs, tag = 'smem constant byte address 0x4 - core index']
  #allocation1 [shape = 'u32[144,128]{1,0:T(1,128)}', space=vmem, size = 0x12000, scoped, tag = 'internal scratch']
  %s0 = inlined_call_operand.vmem [shape: f32[32,96], index: 0, kind: input, shape index: {}]
  %s1 = inlined_call_operand.vmem [shape: f32[96,128], index: 1, kind: input, shape index: {}]
  %s2 = inlined_call_operand.vmem [shape: f32[1,128], index: 2, kind: input, shape index: {}]
  %s3 = inlined_call_operand.vmem [shape: f32[32,128], index: 3, kind: output, shape index: {}]
  %s4 = sld [smem:[#allocation0]]
  $region22: #{mfm_mask_forward.4} parent=0
    _
  %s6 = ssub.s32 1, %s4
  %s7 = scalar_select 0, %s6, %s4
  // Predicated region
  $region2: #{mfm_mask_forward.4} parent=0 // pred_check
    _
  $region3: #{mfm_mask_forward.4} parent=0 // pred_check_branch
    %9 = sbr.rel (0) target = $region5
  $region4: #{mfm_mask_forward.4} parent=0 // pred_region
    _
  $region5: #{mfm_mask_forward.4} parent=0 // pred_fallthru
    _
  // Predicated region
  $region6: #{mfm_mask_forward.4} parent=0 // pred_check
    _
  $region7: #{mfm_mask_forward.4} parent=0 // pred_check_branch
    %11 = sbr.rel (0) target = $region9
  $region8: #{mfm_mask_forward.4} parent=0 // pred_region
    _
  $region9: #{mfm_mask_forward.4} parent=0 // pred_fallthru
    _
  // Predicated region
  $region10: #{mfm_mask_forward.4} parent=0 // pred_check
    _
  $region11: #{mfm_mask_forward.4} parent=0 // pred_check_branch
    %13 = sbr.rel (0) target = $region13
  $region12: #{mfm_mask_forward.4} parent=0 // pred_region
    _
  $region13: #{mfm_mask_forward.4} parent=0 // pred_fallthru
    _
  %v14 = vld [vmem:[%s0] sm:$0xff]
  %v15 = vld [vmem:[%s0 + $0x8] sm:$0xff]
  %v16 = vld [vmem:[%s0 + $0x10] sm:$0xff]
  %v17 = vld [vmem:[%s0 + $0x18] sm:$0xff]
  %v18 = vld [vmem:[%s1] sm:$0xff]
  %v19 = vld [vmem:[%s1 + $0x8] sm:$0xff]
  %v20 = vld [vmem:[%s1 + $0x10] sm:$0xff]
  %v21 = vld [vmem:[%s1 + $0x18] sm:$0xff]
  %v22 = vld [vmem:[%s1 + $0x20] sm:$0xff]
  %v23 = vld [vmem:[%s1 + $0x28] sm:$0xff]
  %v24 = vld [vmem:[%s1 + $0x30] sm:$0xff]
  %v25 = vld [vmem:[%s1 + $0x38] sm:$0xff]
  %v26 = vld [vmem:[%s1 + $0x40] sm:$0xff]
  %v27 = vld [vmem:[%s1 + $0x48] sm:$0xff]
  %v28 = vld [vmem:[%s1 + $0x50] sm:$0xff]
  %v29 = vld [vmem:[%s1 + $0x58] sm:$0xff]
  %v30 = vld [vmem:[%s2] sm:$0x1]
  %v32 = vlaneseq
  %v33 = vshrl.u32 %v32, 7
  %v34 = vsub.s32 0, %v33
  %v35 = vrot.slane %v30, %v34
  %vm37 = vcmask 785408
  %v39 = vsel %vm37, %v14, 0
  %v42 = vsel %vm37, %v15, 0
  %v45 = vsel %vm37, %v16, 0
  %v48 = vsel %vm37, %v17, 0
  %50 = vmatprep.subr.mxu0 0.0
  %51 = vmatpush1.msra.mxu0 %v18
  %52 = vmatprep.subr.mxu0 0.0
  %53 = vmatpush1.msra.mxu0 %v19
  %54 = vmatprep.subr.mxu0 0.0
  %55 = vmatpush1.msra.mxu0 %v20
  %56 = vmatprep.subr.mxu0 0.0
  %57 = vmatpush1.msra.mxu0 %v21
  %58 = vmatprep.subr.mxu0 0.0
  %59 = vmatpush1.msra.mxu0 %v22
  %60 = vmatprep.subr.mxu0 0.0
  %61 = vmatpush1.msra.mxu0 %v23
  %62 = vmatprep.subr.mxu0 0.0
  %63 = vmatpush1.msra.mxu0 %v24
  %64 = vmatprep.subr.mxu0 0.0
  %65 = vmatpush1.msra.mxu0 %v25
  %66 = vmatprep.subr.mxu0 0.0
  %67 = vmatpush1.msra.mxu0 %v26
  %68 = vmatprep.subr.mxu0 0.0
  %69 = vmatpush1.msra.mxu0 %v27
  %70 = vmatprep.subr.mxu0 0.0
  %71 = vmatpush1.msra.mxu0 %v28
  %72 = vmatprep.subr.mxu0 0.0
  %73 = vmatpush1.msra.mxu0 %v29
  %74 = vmatprep.subr.mxu0 0.0
  %75 = vmatpush1.msra.mxu0 0.0
  %76 = vmatprep.subr.mxu0 0.0
  %77 = vmatpush1.msra.mxu0 0.0
  %78 = vmatprep.subr.mxu0 0.0
  %79 = vmatpush1.msra.mxu0 0.0
  %80 = vmatprep.subr.mxu0 0.0
  %81 = vmatpush1.msra.mxu0 0.0
  %82 = vmatprep.subr.mxu0 0.0
  %83 = vmatpush1.msra.mxu0 0.0
  %84 = vmatprep.subr.mxu0 0.0
  %85 = vmatpush1.msra.mxu0 0.0
  %86 = vmatprep.subr.mxu0 0.0
  %87 = vmatpush1.msra.mxu0 0.0
  %88 = vmatprep.subr.mxu0 0.0
  %89 = vmatpush1.msra.mxu0 0.0
  %90 = vmatprep.subr.mxu0 0.0
  %91 = vmatpush1.msra.mxu0 0.0
  %92 = vmatprep.subr.mxu0 0.0
  %93 = vmatpush1.msra.mxu0 0.0
  %94 = vmatprep.subr.mxu0 0.0
  %95 = vmatpush1.msra.mxu0 0.0
  %96 = vmatprep.subr.mxu0 0.0
  %97 = vmatpush1.msra.mxu0 0.0
  %98 = vmatprep.subr.mxu0 0.0
  %99 = vmatpush1.msra.mxu0 0.0
  %100 = vmatprep.subr.mxu0 0.0
  %101 = vmatpush1.msra.mxu0 0.0
  %102 = vmatprep.subr.mxu0 0.0
  %103 = vmatpush1.msra.mxu0 0.0
  %104 = vmatprep.subr.mxu0 0.0
  %105 = vmatpush1.msra.mxu0 0.0
  %106 = vmatprep.subr.mxu0 0.0
  %107 = vmatpush1.msra.mxu0 0.0
  %108 = vmatprep.subr.mxu0 0.0
  %109 = vmatpush1.msra.mxu0 0.0
  %110 = vmatprep.subr.mxu0 0.0
  %111 = vmatpush1.msra.mxu0 0.0
  %112 = vmatprep.subr.mxu0 0.0
  %113 = vmatpush1.msra.mxu0 0.0
  %114 = vmatprep.mubr.f32.mxu0 0.0
  %115 = vmatmul.mubr.f32.gmra.mrb[0].mxu0 %v39
  %v116 = vpop.f32.mrb[0].mxu0
  %v117 = vadd.f32 %v35, %v116
  %v118 = vpop.f32.mrb[0].mxu0
  %119 = vmatprep.mubr.f32.mxu0 0.0
  %120 = vmatmul.mubr.f32.gmra.mrb[0].mxu0 %v42
  %v121 = vpop.f32.mrb[0].mxu0
  %v122 = vadd.f32 %v35, %v121
  %v123 = vpop.f32.mrb[0].mxu0
  %124 = vmatprep.mubr.f32.mxu0 0.0
  %125 = vmatmul.mubr.f32.gmra.mrb[0].mxu0 %v45
  %v126 = vpop.f32.mrb[0].mxu0
  %v127 = vadd.f32 %v35, %v126
  %v128 = vpop.f32.mrb[0].mxu0
  %129 = vmatprep.mubr.f32.mxu0 0.0
  %130 = vmatmul.mubr.f32.gmra.mrb[0].mxu0 %v48
  %v131 = vpop.f32.mrb[0].mxu0
  %v132 = vadd.f32 %v35, %v131
  %v133 = vpop.f32.mrb[0].mxu0
  %134 = vdwg.mxu0
  %135 = vst [vmem:[%s3] sm:$0xff] %v117
  %136 = vst [vmem:[%s3 + $0x8] sm:$0xff] %v122
  %137 = vst [vmem:[%s3 + $0x10] sm:$0xff] %v127
  %138 = vst [vmem:[%s3 + $0x18] sm:$0xff] %v132
  // Predicated region
  $region14: #{mfm_mask_forward.4} parent=0 // pred_check
    _
  $region15: #{mfm_mask_forward.4} parent=0 // pred_check_branch
    %140 = sbr.rel (0) target = $region17
  $region16: #{mfm_mask_forward.4} parent=0 // pred_region
    _
  $region17: #{mfm_mask_forward.4} parent=0 // pred_fallthru
    _
  // Predicated region
  $region18: #{mfm_mask_forward.4} parent=0 // pred_check
    _
  $region19: #{mfm_mask_forward.4} parent=0 // pred_check_branch
    %142 = sbr.rel (0) target = $region21
  $region20: #{mfm_mask_forward.4} parent=0 // pred_region
    _
  $region21: #{mfm_mask_forward.4} parent=0 // pred_fallthru
    _

// kernel: mfm_mask_forward.3
$region0: #{mfm_mask_forward.3}
  #allocation0 [shape = 'u32[]', space=smem, size = 0x4, offset = 0x4, fixed_abs, tag = 'smem constant byte address 0x4 - core index']
  #allocation1 [shape = 'u32[144,128]{1,0:T(1,128)}', space=vmem, size = 0x12000, scoped, tag = 'internal scratch']
  %s0 = inlined_call_operand.vmem [shape: f32[2,3,256], index: 0, kind: input, shape index: {}]
  %s1 = inlined_call_operand.vmem [shape: f32[2,1,512], index: 1, kind: input, shape index: {}]
  %s2 = inlined_call_operand.hbm [shape: bf16[256,512], index: 2, kind: input, shape index: {}]
  %s3 = inlined_call_operand.hbm [shape: bf16[512,256], index: 3, kind: input, shape index: {}]
  %s4 = inlined_call_operand.vmem [shape: f32[3,1], index: 4, kind: input, shape index: {}]
  %s5 = inlined_call_operand.vmem [shape: f32[3,1], index: 5, kind: input, shape index: {}]
  %s6 = inlined_call_operand.vmem [shape: f32[2,3,256], index: 6, kind: output, shape index: {0}]
  %s7 = inlined_call_operand.vmem [shape: f32[2,3,256], index: 7, kind: output, shape index: {1}]
  %8 = xla_tuple %s6, %s7
  %s9 = sld [smem:[#allocation0]]
  $region73: #{mfm_mask_forward.3} parent=0
    _
  %s11 = ssub.s32 1, %s9
  %s12 = scalar_select 0, %s11, %s9
  $region1: #{mfm_mask_forward.3} parent=0
    #allocation2 [shape = 'u8[262144]{0}', space=vmem, size = 0x40000, scoped, tag = 'input window, operand 2, single buffered']
    #allocation3 [shape = 's32[2]{0}', space=sflag, size = 0x8, scoped, tag = 'scoped memory for mfm_mask_forward.3']
    #allocation4 [shape = 'u8[262144]{0}', space=vmem, size = 0x40000, scoped, tag = 'input window, operand 3, single buffered']
    #allocation5 [shape = 's32[1]{0}', space=sflag, size = 0x4, scoped, tag = 'scoped memory for mfm_mask_forward.3']
    %13 = vsyncpa [#allocation3], 0
    %14 = vsyncpa [#allocation5], 0
    loop: start=0, step=1, limit=4
    $region2: #{mfm_mask_forward.3} parent=1 // loop_pre_header
      _
    $region3: #{mfm_mask_forward.3} parent=1 // loop_header
      %s16 = sphi 0, %s20
      %p17 = scmp.ge.s32.totalorder %s16, 4
      %s26 = sphi 0, %s28
      %s29 = sphi 0, %s26
      %s30 = sphi 0, %s29
      %s46 = sphi 0, %s30
      %s52 = sphi 0, %s54
      %s55 = sphi 0, %s52
      %s56 = sphi 0, %s55
      %s72 = sphi 0, %s56
      %s76 = sphi 0, %s76
      %s78 = sphi 0, %s76
      %s79 = sphi 0, %s78
      %s93 = sphi 0, %s79
      %s97 = sphi 0, %s97
      %s99 = sphi 0, %s97
      %s100 = sphi 0, %s99
      %s114 = sphi 0, %s100
      %s118 = sphi 0, %s118
      %s120 = sphi 0, %s118
      %s121 = sphi 0, %s120
      %s135 = sphi 0, %s121
      %s139 = sphi 0, %s139
      %s141 = sphi 0, %s139
      %s142 = sphi 0, %s141
      %s156 = sphi 0, %s142
      %s162 = sphi 0, %s164
      %s165 = sphi 0, %s162
      %s166 = sphi 0, %s165
      %s182 = sphi 0, %s166
      %s188 = sphi 0, %s190
      %s191 = sphi 0, %s188
      %s192 = sphi 0, %s191
      %s208 = sphi 0, %s192
    $region4: #{mfm_mask_forward.3} parent=1 // loop_header_branch
      %19 = sbr.rel (%p17) target = $region8
    $region5: #{mfm_mask_forward.3} parent=1 // loop_body
      %s21 = ssub.s32 %s16, 1
      %s22 = ssub.s32 %s16, 2
      %s23 = sadd.s32 %s16, 1
      %s24 = ssub.s32 %s16, %s23
      %p25 = scmp.eq.s32.totalorder %s24, 0
      %s27 = sadd.s32 %s26, 1
      %s28 = scalar_select %p25, %s26, %s27
      %p31 = pneg %p25
      %p32 = scmp.eq.s32.totalorder %s16, 1
      %p33 = por %p31, %p32
      %p34 = scmp.ne.s32.totalorder %s26, %s29
      %p35 = scmp.eq.s32.totalorder %s16, 0
      %p36 = por %p34, %p35
      %p37 = scmp.ne.s32.totalorder %s26, %s29
      %p38 = scmp.eq.s32.totalorder %s21, 1
      %p39 = por %p37, %p38
      %p40 = scmp.ne.s32.totalorder %s29, %s30
      %p41 = scmp.eq.s32.totalorder %s21, 0
      %p42 = por %p40, %p41
      %p43 = scmp.ne.s32.totalorder %s29, %s30
      %p44 = scmp.eq.s32.totalorder %s22, 1
      %p45 = por %p43, %p44
      %p47 = scmp.ne.s32.totalorder %s30, %s46
      %p48 = scmp.eq.s32.totalorder %s22, 0
      %p49 = por %p47, %p48
      %s50 = ssub.s32 %s16, %s23
      %p51 = scmp.eq.s32.totalorder %s50, 0
      %s53 = sadd.s32 %s52, 1
      %s54 = scalar_select %p51, %s52, %s53
      %p57 = pneg %p51
      %p58 = scmp.eq.s32.totalorder %s16, 1
      %p59 = por %p57, %p58
      %p60 = scmp.ne.s32.totalorder %s52, %s55
      %p61 = scmp.eq.s32.totalorder %s16, 0
      %p62 = por %p60, %p61
      %p63 = scmp.ne.s32.totalorder %s52, %s55
      %p64 = scmp.eq.s32.totalorder %s21, 1
      %p65 = por %p63, %p64
      %p66 = scmp.ne.s32.totalorder %s55, %s56
      %p67 = scmp.eq.s32.totalorder %s21, 0
      %p68 = por %p66, %p67
      %p69 = scmp.ne.s32.totalorder %s55, %s56
      %p70 = scmp.eq.s32.totalorder %s22, 1
      %p71 = por %p69, %p70
      %p73 = scmp.ne.s32.totalorder %s56, %s72
      %p74 = scmp.eq.s32.totalorder %s22, 0
      %p75 = por %p73, %p74
      %s77 = sadd.s32 %s76, 1
      %p80 = scmp.eq.s32.totalorder %s16, 1
      %p81 = scmp.ne.s32.totalorder %s76, %s78
      %p82 = scmp.eq.s32.totalorder %s16, 0
      %p83 = por %p81, %p82
      %p84 = scmp.ne.s32.totalorder %s76, %s78
      %p85 = scmp.eq.s32.totalorder %s21, 1
      %p86 = por %p84, %p85
      %p87 = scmp.ne.s32.totalorder %s78, %s79
      %p88 = scmp.eq.s32.totalorder %s21, 0
      %p89 = por %p87, %p88
      %p90 = scmp.ne.s32.totalorder %s78, %s79
      %p91 = scmp.eq.s32.totalorder %s22, 1
      %p92 = por %p90, %p91
      %p94 = scmp.ne.s32.totalorder %s79, %s93
      %p95 = scmp.eq.s32.totalorder %s22, 0
      %p96 = por %p94, %p95
      %s98 = sadd.s32 %s97, 1
      %p101 = scmp.eq.s32.totalorder %s16, 1
      %p102 = scmp.ne.s32.totalorder %s97, %s99
      %p103 = scmp.eq.s32.totalorder %s16, 0
      %p104 = por %p102, %p103
      %p105 = scmp.ne.s32.totalorder %s97, %s99
      %p106 = scmp.eq.s32.totalorder %s21, 1
      %p107 = por %p105, %p106
      %p108 = scmp.ne.s32.totalorder %s99, %s100
      %p109 = scmp.eq.s32.totalorder %s21, 0
      %p110 = por %p108, %p109
      %p111 = scmp.ne.s32.totalorder %s99, %s100
      %p112 = scmp.eq.s32.totalorder %s22, 1
      %p113 = por %p111, %p112
      %p115 = scmp.ne.s32.totalorder %s100, %s114
      %p116 = scmp.eq.s32.totalorder %s22, 0
      %p117 = por %p115, %p116
      %s119 = sadd.s32 %s118, 1
      %p122 = scmp.eq.s32.totalorder %s16, 1
      %p123 = scmp.ne.s32.totalorder %s118, %s120
      %p124 = scmp.eq.s32.totalorder %s16, 0
      %p125 = por %p123, %p124
      %p126 = scmp.ne.s32.totalorder %s118, %s120
      %p127 = scmp.eq.s32.totalorder %s21, 1
      %p128 = por %p126, %p127
      %p129 = scmp.ne.s32.totalorder %s120, %s121
      %p130 = scmp.eq.s32.totalorder %s21, 0
      %p131 = por %p129, %p130
      %p132 = scmp.ne.s32.totalorder %s120, %s121
      %p133 = scmp.eq.s32.totalorder %s22, 1
      %p134 = por %p132, %p133
      %p136 = scmp.ne.s32.totalorder %s121, %s135
      %p137 = scmp.eq.s32.totalorder %s22, 0
      %p138 = por %p136, %p137
      %s140 = sadd.s32 %s139, 1
      %p143 = scmp.eq.s32.totalorder %s16, 1
      %p144 = scmp.ne.s32.totalorder %s139, %s141
      %p145 = scmp.eq.s32.totalorder %s16, 0
      %p146 = por %p144, %p145
      %p147 = scmp.ne.s32.totalorder %s139, %s141
      %p148 = scmp.eq.s32.totalorder %s21, 1
      %p149 = por %p147, %p148
      %p150 = scmp.ne.s32.totalorder %s141, %s142
      %p151 = scmp.eq.s32.totalorder %s21, 0
      %p152 = por %p150, %p151
      %p153 = scmp.ne.s32.totalorder %s141, %s142
      %p154 = scmp.eq.s32.totalorder %s22, 1
      %p155 = por %p153, %p154
      %p157 = scmp.ne.s32.totalorder %s142, %s156
      %p158 = scmp.eq.s32.totalorder %s22, 0
      %p159 = por %p157, %p158
      %s160 = ssub.s32 %s16, %s23
      %p161 = scmp.eq.s32.totalorder %s160, 0
      %s163 = sadd.s32 %s162, 1
      %s164 = scalar_select %p161, %s162, %s163
      %p167 = pneg %p161
      %p168 = scmp.eq.s32.totalorder %s16, 1
      %p169 = por %p167, %p168
      %p170 = scmp.ne.s32.totalorder %s162, %s165
      %p171 = scmp.eq.s32.totalorder %s16, 0
      %p172 = por %p170, %p171
      %p173 = scmp.ne.s32.totalorder %s162, %s165
      %p174 = scmp.eq.s32.totalorder %s21, 1
      %p175 = por %p173, %p174
      %p176 = scmp.ne.s32.totalorder %s165, %s166
      %p177 = scmp.eq.s32.totalorder %s21, 0
      %p178 = por %p176, %p177
      %p179 = scmp.ne.s32.totalorder %s165, %s166
      %p180 = scmp.eq.s32.totalorder %s22, 1
      %p181 = por %p179, %p180
      %p183 = scmp.ne.s32.totalorder %s166, %s182
      %p184 = scmp.eq.s32.totalorder %s22, 0
      %p185 = por %p183, %p184
      %s186 = ssub.s32 %s16, %s23
      %p187 = scmp.eq.s32.totalorder %s186, 0
      %s189 = sadd.s32 %s188, 1
      %s190 = scalar_select %p187, %s188, %s189
      %p193 = pneg %p187
      %p194 = scmp.eq.s32.totalorder %s16, 1
      %p195 = por %p193, %p194
      %p196 = scmp.ne.s32.totalorder %s188, %s191
      %p197 = scmp.eq.s32.totalorder %s16, 0
      %p198 = por %p196, %p197
      %p199 = scmp.ne.s32.totalorder %s188, %s191
      %p200 = scmp.eq.s32.totalorder %s21, 1
      %p201 = por %p199, %p200
      %p202 = scmp.ne.s32.totalorder %s191, %s192
      %p203 = scmp.eq.s32.totalorder %s21, 0
      %p204 = por %p202, %p203
      %p205 = scmp.ne.s32.totalorder %s191, %s192
      %p206 = scmp.eq.s32.totalorder %s22, 1
      %p207 = por %p205, %p206
      %p209 = scmp.ne.s32.totalorder %s192, %s208
      %p210 = scmp.eq.s32.totalorder %s22, 0
      %p211 = por %p209, %p210
      %p212 = scmp.le.s32.totalorder 1, %s16
      %p213 = scmp.lt.s32.totalorder %s16, 3
      %p214 = pnand %p212, %p213
      %p215 = pneg %p214
      // Predicated region
      $region9: #{mfm_mask_forward.3} parent=5 // pred_check
        _
      $region10: #{mfm_mask_forward.3} parent=5 // pred_check_branch
        %217 = sbr.rel (%p214) target = $region12
      $region11: #{mfm_mask_forward.3} parent=5 // pred_region
        %s218 = ssub.s32 %s16, 1
        // Predicated region
        $region13: #{mfm_mask_forward.3} parent=11 // pred_check
          %p219 = pneg %p89
        $region14: #{mfm_mask_forward.3} parent=11 // pred_check_branch
          %221 = sbr.rel (%p219) target = $region16
        $region15: #{mfm_mask_forward.3} parent=11 // pred_region
          %s223 = ssub.s32 8192, 8192
          %224 = vsyncadd [#allocation3], %s223
          %s225 = sshll.u32 [#allocation2], 4
          %s226 = int_to_ptr.vmem [resolvable:$true] %s225
          %231 = dma.hbm_to_vmem [thread:$0]  %s2, 8192, %s226, [#allocation3], 256, 256, 16
        $region16: #{mfm_mask_forward.3} parent=11 // pred_fallthru
          _
        // Predicated region
        $region17: #{mfm_mask_forward.3} parent=11 // pred_check
          %p232 = pneg %p110
        $region18: #{mfm_mask_forward.3} parent=11 // pred_check_branch
          %234 = sbr.rel (%p232) target = $region20
        $region19: #{mfm_mask_forward.3} parent=11 // pred_region
          %s236 = ssub.s32 8192, 8192
          %237 = vsyncadd [#allocation5], %s236
          %s238 = sshll.u32 [#allocation4], 4
          %s239 = int_to_ptr.vmem [resolvable:$true] %s238
          %244 = dma.hbm_to_vmem [thread:$0]  %s3, 8192, %s239, [#allocation5], 128, 128, 8
        $region20: #{mfm_mask_forward.3} parent=11 // pred_fallthru
          _
        // Predicated region
        $region21: #{mfm_mask_forward.3} parent=11 // pred_check
          %p245 = pneg %p131
        $region22: #{mfm_mask_forward.3} parent=11 // pred_check_branch
          %247 = sbr.rel (%p245) target = $region24
        $region23: #{mfm_mask_forward.3} parent=11 // pred_region
          _
        $region24: #{mfm_mask_forward.3} parent=11 // pred_fallthru
          _
        // Predicated region
        $region25: #{mfm_mask_forward.3} parent=11 // pred_check
          %p248 = pneg %p152
        $region26: #{mfm_mask_forward.3} parent=11 // pred_check_branch
          %250 = sbr.rel (%p248) target = $region28
        $region27: #{mfm_mask_forward.3} parent=11 // pred_region
          _
        $region28: #{mfm_mask_forward.3} parent=11 // pred_fallthru
          _
      $region12: #{mfm_mask_forward.3} parent=5 // pred_fallthru
        _
      %p251 = scmp.lt.s32.totalorder %s16, 2
      // Predicated region
      $region29: #{mfm_mask_forward.3} parent=5 // pred_check
        %p252 = pneg %p251
      $region30: #{mfm_mask_forward.3} parent=5 // pred_check_branch
        %254 = sbr.rel (%p252) target = $region32
      $region31: #{mfm_mask_forward.3} parent=5 // pred_region
        // Predicated region
        $region33: #{mfm_mask_forward.3} parent=31 // pred_check
          %p255 = pneg %p36
        $region34: #{mfm_mask_forward.3} parent=31 // pred_check_branch
          %257 = sbr.rel (%p255) target = $region36
        $region35: #{mfm_mask_forward.3} parent=31 // pred_region
          %p258 = scmp.lt.s32.totalorder %s16, 1
          %s259 = scalar_select %p258, %s16, 1
          %s260 = smul.addr %s259, 2
          %s261 = smul.addr %s260, 4
          %s262 = scalar_lea.vmem %s0, %s261
        $region36: #{mfm_mask_forward.3} parent=31 // pred_fallthru
          _
        // Predicated region
        $region37: #{mfm_mask_forward.3} parent=31 // pred_check
          %p263 = pneg %p62
        $region38: #{mfm_mask_forward.3} parent=31 // pred_check_branch
          %265 = sbr.rel (%p263) target = $region40
        $region39: #{mfm_mask_forward.3} parent=31 // pred_region
          %p266 = scmp.lt.s32.totalorder %s16, 1
          %s267 = scalar_select %p266, %s16, 1
          %s268 = smul.addr %s267, 4
          %s269 = scalar_lea.vmem %s1, %s268
        $region40: #{mfm_mask_forward.3} parent=31 // pred_fallthru
          _
      $region32: #{mfm_mask_forward.3} parent=5 // pred_fallthru
        _
      %p270 = scmp.le.s32.totalorder 1, %s16
      %p271 = scmp.lt.s32.totalorder %s16, 3
      %p272 = pnand %p270, %p271
      %p273 = pneg %p272
      // Predicated region
      $region41: #{mfm_mask_forward.3} parent=5 // pred_check
        _
      $region42: #{mfm_mask_forward.3} parent=5 // pred_check_branch
        %275 = sbr.rel (%p272) target = $region44
      $region43: #{mfm_mask_forward.3} parent=5 // pred_region
        %s276 = ssub.s32 %s16, 1
        // Predicated region
        $region45: #{mfm_mask_forward.3} parent=43 // pred_check
          %p277 = pneg %p89
        $region46: #{mfm_mask_forward.3} parent=43 // pred_check_branch
          %279 = sbr.rel (%p277) target = $region48
        $region47: #{mfm_mask_forward.3} parent=43 // pred_region
          %280 = dma.done [#allocation3], 8192
        $region48: #{mfm_mask_forward.3} parent=43 // pred_fallthru
          _
        // Predicated region
        $region49: #{mfm_mask_forward.3} parent=43 // pred_check
          %p281 = pneg %p110
        $region50: #{mfm_mask_forward.3} parent=43 // pred_check_branch
          %283 = sbr.rel (%p281) target = $region52
        $region51: #{mfm_mask_forward.3} parent=43 // pred_region
          %284 = dma.done [#allocation5], 8192
        $region52: #{mfm_mask_forward.3} parent=43 // pred_fallthru
          _
        %p285 = scmp.lt.s32.totalorder %s21, 1
        %s286 = scalar_select %p285, %s21, 1
        %s287 = smul.addr %s286, 2
        %s288 = smul.addr %s287, 4
        %s289 = scalar_lea.vmem %s0, %s288
        %p290 = pneg %p42
        %p291 = pneg %p39
        %p292 = scmp.lt.s32.totalorder %s21, 1
        %s293 = scalar_select %p292, %s21, 1
        %s294 = smul.addr %s293, 4
        %s295 = scalar_lea.vmem %s1, %s294
        %p296 = pneg %p68
        %p297 = pneg %p65
        %p298 = pneg %p89
        %p299 = pneg %p86
        %p300 = pneg %p110
        %p301 = pneg %p107
        %p302 = pneg %p131
        %p303 = pneg %p128
        %p304 = pneg %p152
        %p305 = pneg %p149
        %p306 = pneg %p178
        %p307 = pneg %p175
        %p308 = scmp.lt.s32.totalorder %s21, 1
        %s309 = scalar_select %p308, %s21, 1
        %s310 = smul.addr %s309, 2
        %s311 = smul.addr %s310, 4
        %s312 = scalar_lea.vmem %s6, %s311
        %p313 = pneg %p204
        %p314 = pneg %p201
        %p315 = scmp.lt.s32.totalorder %s21, 1
        %s316 = scalar_select %p315, %s21, 1
        %s317 = smul.addr %s316, 2
        %s318 = smul.addr %s317, 4
        %s319 = scalar_lea.vmem %s7, %s318
        %p320 = scmp.lt.s32.totalorder %s21, 1
        %s321 = scalar_select %p320, %s21, 1
        %s322 = smul.addr %s321, 2
        %s323 = smul.addr %s322, 4
        %s324 = scalar_lea.vmem %s0, %s323
        %p325 = scmp.lt.s32.totalorder %s21, 1
        %s326 = scalar_select %p325, %s21, 1
        %s327 = smul.addr %s326, 4
        %s328 = scalar_lea.vmem %s1, %s327
        %p329 = scmp.lt.s32.totalorder %s21, 1
        %s330 = scalar_select %p329, %s21, 1
        %s331 = smul.addr %s330, 2
        %s332 = smul.addr %s331, 4
        %s333 = scalar_lea.vmem %s6, %s332
        %p334 = scmp.lt.s32.totalorder %s21, 1
        %s335 = scalar_select %p334, %s21, 1
        %s336 = smul.addr %s335, 2
        %s337 = smul.addr %s336, 4
        %s338 = scalar_lea.vmem %s7, %s337
        %v339 = vld [vmem:[%s324] sm:$0x77]
        %v341 = vcombine.high %v339, %v339
        %v343 = vpack.c.bf16 %v339, %v339
        %v344 = vpack.c.bf16 %v341, %v341
        %v345 = vld [vmem:[#allocation2] sm:$0xff]
        %v346 = vld [vmem:[#allocation2 + $0x8] sm:$0xff]
        %v347 = vld [vmem:[#allocation2 + $0x10] sm:$0xff]
        %v348 = vld [vmem:[#allocation2 + $0x18] sm:$0xff]
        %v349 = vld [vmem:[#allocation2 + $0x20] sm:$0xff]
        %v350 = vld [vmem:[#allocation2 + $0x28] sm:$0xff]
        %v351 = vld [vmem:[#allocation2 + $0x30] sm:$0xff]
        %v352 = vld [vmem:[#allocation2 + $0x38] sm:$0xff]
        %v353 = vld [vmem:[#allocation2 + $0x40] sm:$0xff]
        %v354 = vld [vmem:[#allocation2 + $0x48] sm:$0xff]
        %v355 = vld [vmem:[#allocation2 + $0x50] sm:$0xff]
        %v356 = vld [vmem:[#allocation2 + $0x58] sm:$0xff]
        %v357 = vld [vmem:[#allocation2 + $0x60] sm:$0xff]
        %v358 = vld [vmem:[#allocation2 + $0x68] sm:$0xff]
        %v359 = vld [vmem:[#allocation2 + $0x70] sm:$0xff]
        %v360 = vld [vmem:[#allocation2 + $0x78] sm:$0xff]
        %v361 = vld [vmem:[#allocation2 + $0x80] sm:$0xff]
        %v362 = vld [vmem:[#allocation2 + $0x88] sm:$0xff]
        %v363 = vld [vmem:[#allocation2 + $0x90] sm:$0xff]
        %v364 = vld [vmem:[#allocation2 + $0x98] sm:$0xff]
        %v365 = vld [vmem:[#allocation2 + $0xa0] sm:$0xff]
        %v366 = vld [vmem:[#allocation2 + $0xa8] sm:$0xff]
        %v367 = vld [vmem:[#allocation2 + $0xb0] sm:$0xff]
        %v368 = vld [vmem:[#allocation2 + $0xb8] sm:$0xff]
        %v369 = vld [vmem:[#allocation2 + $0xc0] sm:$0xff]
        %v370 = vld [vmem:[#allocation2 + $0xc8] sm:$0xff]
        %v371 = vld [vmem:[#allocation2 + $0xd0] sm:$0xff]
        %v372 = vld [vmem:[#allocation2 + $0xd8] sm:$0xff]
        %v373 = vld [vmem:[#allocation2 + $0xe0] sm:$0xff]
        %v374 = vld [vmem:[#allocation2 + $0xe8] sm:$0xff]
        %v375 = vld [vmem:[#allocation2 + $0xf0] sm:$0xff]
        %v376 = vld [vmem:[#allocation2 + $0xf8] sm:$0xff]
        %v377 = vld [vmem:[#allocation2 + $0x100] sm:$0xff]
        %v378 = vld [vmem:[#allocation2 + $0x108] sm:$0xff]
        %v379 = vld [vmem:[#allocation2 + $0x110] sm:$0xff]
        %v380 = vld [vmem:[#allocation2 + $0x118] sm:$0xff]
        %v381 = vld [vmem:[#allocation2 + $0x120] sm:$0xff]
        %v382 = vld [vmem:[#allocation2 + $0x128] sm:$0xff]
        %v383 = vld [vmem:[#allocation2 + $0x130] sm:$0xff]
        %v384 = vld [vmem:[#allocation2 + $0x138] sm:$0xff]
        %v385 = vld [vmem:[#allocation2 + $0x140] sm:$0xff]
        %v386 = vld [vmem:[#allocation2 + $0x148] sm:$0xff]
        %v387 = vld [vmem:[#allocation2 + $0x150] sm:$0xff]
        %v388 = vld [vmem:[#allocation2 + $0x158] sm:$0xff]
        %v389 = vld [vmem:[#allocation2 + $0x160] sm:$0xff]
        %v390 = vld [vmem:[#allocation2 + $0x168] sm:$0xff]
        %v391 = vld [vmem:[#allocation2 + $0x170] sm:$0xff]
        %v392 = vld [vmem:[#allocation2 + $0x178] sm:$0xff]
        %v393 = vld [vmem:[#allocation2 + $0x180] sm:$0xff]
        %v394 = vld [vmem:[#allocation2 + $0x188] sm:$0xff]
        %v395 = vld [vmem:[#allocation2 + $0x190] sm:$0xff]
        %v396 = vld [vmem:[#allocation2 + $0x198] sm:$0xff]
        %v397 = vld [vmem:[#allocation2 + $0x1a0] sm:$0xff]
        %v398 = vld [vmem:[#allocation2 + $0x1a8] sm:$0xff]
        %v399 = vld [vmem:[#allocation2 + $0x1b0] sm:$0xff]
        %v400 = vld [vmem:[#allocation2 + $0x1b8] sm:$0xff]
        %v401 = vld [vmem:[#allocation2 + $0x1c0] sm:$0xff]
        %v402 = vld [vmem:[#allocation2 + $0x1c8] sm:$0xff]
        %v403 = vld [vmem:[#allocation2 + $0x1d0] sm:$0xff]
        %v404 = vld [vmem:[#allocation2 + $0x1d8] sm:$0xff]
        %v405 = vld [vmem:[#allocation2 + $0x1e0] sm:$0xff]
        %v406 = vld [vmem:[#allocation2 + $0x1e8] sm:$0xff]
        %v407 = vld [vmem:[#allocation2 + $0x1f0] sm:$0xff]
        %v408 = vld [vmem:[#allocation2 + $0x1f8] sm:$0xff]
        %v473 = vunpack.c.l.b16 %v345
        %v474 = vunpack.c.h.b16 %v345
        %v475 = vunpack.c.l.b16 %v346
        %v476 = vunpack.c.h.b16 %v346
        %v477 = vunpack.c.l.b16 %v347
        %v478 = vunpack.c.h.b16 %v347
        %v479 = vunpack.c.l.b16 %v348
        %v480 = vunpack.c.h.b16 %v348
        %v481 = vunpack.c.l.b16 %v349
        %v482 = vunpack.c.h.b16 %v349
        %v483 = vunpack.c.l.b16 %v350
        %v484 = vunpack.c.h.b16 %v350
        %v485 = vunpack.c.l.b16 %v351
        %v486 = vunpack.c.h.b16 %v351
        %v487 = vunpack.c.l.b16 %v352
        %v488 = vunpack.c.h.b16 %v352
        %v489 = vunpack.c.l.b16 %v353
        %v490 = vunpack.c.h.b16 %v353
        %v491 = vunpack.c.l.b16 %v354
        %v492 = vunpack.c.h.b16 %v354
        %v493 = vunpack.c.l.b16 %v355
        %v494 = vunpack.c.h.b16 %v355
        %v495 = vunpack.c.l.b16 %v356
        %v496 = vunpack.c.h.b16 %v356
        %v497 = vunpack.c.l.b16 %v357
        %v498 = vunpack.c.h.b16 %v357
        %v499 = vunpack.c.l.b16 %v358
        %v500 = vunpack.c.h.b16 %v358
        %v501 = vunpack.c.l.b16 %v359
        %v502 = vunpack.c.h.b16 %v359
        %v503 = vunpack.c.l.b16 %v360
        %v504 = vunpack.c.h.b16 %v360
        %v505 = vunpack.c.l.b16 %v361
        %v506 = vunpack.c.h.b16 %v361
        %v507 = vunpack.c.l.b16 %v362
        %v508 = vunpack.c.h.b16 %v362
        %v509 = vunpack.c.l.b16 %v363
        %v510 = vunpack.c.h.b16 %v363
        %v511 = vunpack.c.l.b16 %v364
        %v512 = vunpack.c.h.b16 %v364
        %v513 = vunpack.c.l.b16 %v365
        %v514 = vunpack.c.h.b16 %v365
        %v515 = vunpack.c.l.b16 %v366
        %v516 = vunpack.c.h.b16 %v366
        %v517 = vunpack.c.l.b16 %v367
        %v518 = vunpack.c.h.b16 %v367
        %v519 = vunpack.c.l.b16 %v368
        %v520 = vunpack.c.h.b16 %v368
        %v521 = vunpack.c.l.b16 %v369
        %v522 = vunpack.c.h.b16 %v369
        %v523 = vunpack.c.l.b16 %v370
        %v524 = vunpack.c.h.b16 %v370
        %v525 = vunpack.c.l.b16 %v371
        %v526 = vunpack.c.h.b16 %v371
        %v527 = vunpack.c.l.b16 %v372
        %v528 = vunpack.c.h.b16 %v372
        %v529 = vunpack.c.l.b16 %v373
        %v530 = vunpack.c.h.b16 %v373
        %v531 = vunpack.c.l.b16 %v374
        %v532 = vunpack.c.h.b16 %v374
        %v533 = vunpack.c.l.b16 %v375
        %v534 = vunpack.c.h.b16 %v375
        %v535 = vunpack.c.l.b16 %v376
        %v536 = vunpack.c.h.b16 %v376
        %v537 = vunpack.c.l.b16 %v377
        %v538 = vunpack.c.h.b16 %v377
        %v539 = vunpack.c.l.b16 %v378
        %v540 = vunpack.c.h.b16 %v378
        %v541 = vunpack.c.l.b16 %v379
        %v542 = vunpack.c.h.b16 %v379
        %v543 = vunpack.c.l.b16 %v380
        %v544 = vunpack.c.h.b16 %v380
        %v545 = vunpack.c.l.b16 %v381
        %v546 = vunpack.c.h.b16 %v381
        %v547 = vunpack.c.l.b16 %v382
        %v548 = vunpack.c.h.b16 %v382
        %v549 = vunpack.c.l.b16 %v383
        %v550 = vunpack.c.h.b16 %v383
        %v551 = vunpack.c.l.b16 %v384
        %v552 = vunpack.c.h.b16 %v384
        %v553 = vunpack.c.l.b16 %v385
        %v554 = vunpack.c.h.b16 %v385
        %v555 = vunpack.c.l.b16 %v386
        %v556 = vunpack.c.h.b16 %v386
        %v557 = vunpack.c.l.b16 %v387
        %v558 = vunpack.c.h.b16 %v387
        %v559 = vunpack.c.l.b16 %v388
        %v560 = vunpack.c.h.b16 %v388
        %v561 = vunpack.c.l.b16 %v389
        %v562 = vunpack.c.h.b16 %v389
        %v563 = vunpack.c.l.b16 %v390
        %v564 = vunpack.c.h.b16 %v390
        %v565 = vunpack.c.l.b16 %v391
        %v566 = vunpack.c.h.b16 %v391
        %v567 = vunpack.c.l.b16 %v392
        %v568 = vunpack.c.h.b16 %v392
        %v569 = vunpack.c.l.b16 %v393
        %v570 = vunpack.c.h.b16 %v393
        %v571 = vunpack.c.l.b16 %v394
        %v572 = vunpack.c.h.b16 %v394
        %v573 = vunpack.c.l.b16 %v395
        %v574 = vunpack.c.h.b16 %v395
        %v575 = vunpack.c.l.b16 %v396
        %v576 = vunpack.c.h.b16 %v396
        %v577 = vunpack.c.l.b16 %v397
        %v578 = vunpack.c.h.b16 %v397
        %v579 = vunpack.c.l.b16 %v398
        %v580 = vunpack.c.h.b16 %v398
        %v581 = vunpack.c.l.b16 %v399
        %v582 = vunpack.c.h.b16 %v399
        %v583 = vunpack.c.l.b16 %v400
        %v584 = vunpack.c.h.b16 %v400
        %v585 = vunpack.c.l.b16 %v401
        %v586 = vunpack.c.h.b16 %v401
        %v587 = vunpack.c.l.b16 %v402
        %v588 = vunpack.c.h.b16 %v402
        %v589 = vunpack.c.l.b16 %v403
        %v590 = vunpack.c.h.b16 %v403
        %v591 = vunpack.c.l.b16 %v404
        %v592 = vunpack.c.h.b16 %v404
        %v593 = vunpack.c.l.b16 %v405
        %v594 = vunpack.c.h.b16 %v405
        %v595 = vunpack.c.l.b16 %v406
        %v596 = vunpack.c.h.b16 %v406
        %v597 = vunpack.c.l.b16 %v407
        %v598 = vunpack.c.h.b16 %v407
        %v599 = vunpack.c.l.b16 %v408
        %v600 = vunpack.c.h.b16 %v408
        %v601 = vpack.c.b16 %v477, %v473
        %v602 = vpack.c.b16 %v478, %v474
        %v603 = vpack.c.b16 %v479, %v475
        %v604 = vpack.c.b16 %v480, %v476
        %v605 = vpack.c.b16 %v485, %v481
        %v606 = vpack.c.b16 %v486, %v482
        %v607 = vpack.c.b16 %v487, %v483
        %v608 = vpack.c.b16 %v488, %v484
        %v609 = vpack.c.b16 %v493, %v489
        %v610 = vpack.c.b16 %v494, %v490
        %v611 = vpack.c.b16 %v495, %v491
        %v612 = vpack.c.b16 %v496, %v492
        %v613 = vpack.c.b16 %v501, %v497
        %v614 = vpack.c.b16 %v502, %v498
        %v615 = vpack.c.b16 %v503, %v499
        %v616 = vpack.c.b16 %v504, %v500
        %v617 = vpack.c.b16 %v509, %v505
        %v618 = vpack.c.b16 %v510, %v506
        %v619 = vpack.c.b16 %v511, %v507
        %v620 = vpack.c.b16 %v512, %v508
        %v621 = vpack.c.b16 %v517, %v513
        %v622 = vpack.c.b16 %v518, %v514
        %v623 = vpack.c.b16 %v519, %v515
        %v624 = vpack.c.b16 %v520, %v516
        %v625 = vpack.c.b16 %v525, %v521
        %v626 = vpack.c.b16 %v526, %v522
        %v627 = vpack.c.b16 %v527, %v523
        %v628 = vpack.c.b16 %v528, %v524
        %v629 = vpack.c.b16 %v533, %v529
        %v630 = vpack.c.b16 %v534, %v530
        %v631 = vpack.c.b16 %v535, %v531
        %v632 = vpack.c.b16 %v536, %v532
        %v633 = vpack.c.b16 %v541, %v537
        %v634 = vpack.c.b16 %v542, %v538
        %v635 = vpack.c.b16 %v543, %v539
        %v636 = vpack.c.b16 %v544, %v540
        %v637 = vpack.c.b16 %v549, %v545
        %v638 = vpack.c.b16 %v550, %v546
        %v639 = vpack.c.b16 %v551, %v547
        %v640 = vpack.c.b16 %v552, %v548
        %v641 = vpack.c.b16 %v557, %v553
        %v642 = vpack.c.b16 %v558, %v554
        %v643 = vpack.c.b16 %v559, %v555
        %v644 = vpack.c.b16 %v560, %v556
        %v645 = vpack.c.b16 %v565, %v561
        %v646 = vpack.c.b16 %v566, %v562
        %v647 = vpack.c.b16 %v567, %v563
        %v648 = vpack.c.b16 %v568, %v564
        %v649 = vpack.c.b16 %v573, %v569
        %v650 = vpack.c.b16 %v574, %v570
        %v651 = vpack.c.b16 %v575, %v571
        %v652 = vpack.c.b16 %v576, %v572
        %v653 = vpack.c.b16 %v581, %v577
        %v654 = vpack.c.b16 %v582, %v578
        %v655 = vpack.c.b16 %v583, %v579
        %v656 = vpack.c.b16 %v584, %v580
        %v657 = vpack.c.b16 %v589, %v585
        %v658 = vpack.c.b16 %v590, %v586
        %v659 = vpack.c.b16 %v591, %v587
        %v660 = vpack.c.b16 %v592, %v588
        %v661 = vpack.c.b16 %v597, %v593
        %v662 = vpack.c.b16 %v598, %v594
        %v663 = vpack.c.b16 %v599, %v595
        %v664 = vpack.c.b16 %v600, %v596
        %729 = vmatprep.subr.bf16.mxu0 %v602
        %730 = vmatpush1.bf16.msra.mxu0 %v601
        %731 = vmatprep.subr.bf16.mxu0 %v606
        %732 = vmatpush1.bf16.msra.mxu0 %v605
        %733 = vmatprep.subr.bf16.mxu0 %v610
        %734 = vmatpush1.bf16.msra.mxu0 %v609
        %735 = vmatprep.subr.bf16.mxu0 %v614
        %736 = vmatpush1.bf16.msra.mxu0 %v613
        %737 = vmatprep.subr.bf16.mxu0 %v618
        %738 = vmatpush1.bf16.msra.mxu0 %v617
        %739 = vmatprep.subr.bf16.mxu0 %v622
        %740 = vmatpush1.bf16.msra.mxu0 %v621
        %741 = vmatprep.subr.bf16.mxu0 %v626
        %742 = vmatpush1.bf16.msra.mxu0 %v625
        %743 = vmatprep.subr.bf16.mxu0 %v630
        %744 = vmatpush1.bf16.msra.mxu0 %v629
        %745 = vmatprep.subr.bf16.mxu0 %v634
        %746 = vmatpush1.bf16.msra.mxu0 %v633
        %747 = vmatprep.subr.bf16.mxu0 %v638
        %748 = vmatpush1.bf16.msra.mxu0 %v637
        %749 = vmatprep.subr.bf16.mxu0 %v642
        %750 = vmatpush1.bf16.msra.mxu0 %v641
        %751 = vmatprep.subr.bf16.mxu0 %v646
        %752 = vmatpush1.bf16.msra.mxu0 %v645
        %753 = vmatprep.subr.bf16.mxu0 %v650
        %754 = vmatpush1.bf16.msra.mxu0 %v649
        %755 = vmatprep.subr.bf16.mxu0 %v654
        %756 = vmatpush1.bf16.msra.mxu0 %v653
        %757 = vmatprep.subr.bf16.mxu0 %v658
        %758 = vmatpush1.bf16.msra.mxu0 %v657
        %759 = vmatprep.subr.bf16.mxu0 %v662
        %760 = vmatpush1.bf16.msra.mxu0 %v661
        %761 = vmatprep.mubr.bf16.mxu0 %v344
        %762 = vmatmul.mubr.bf16.gmra.mrb[0].mxu0 %v343
        %v763 = vpop.f32.mrb[0].mxu0
        %v764 = vadd.f32 0.0, %v763
        %v765 = vpop.f32.mrb[0].mxu0
        %v766 = vadd.f32 0.0, %v765
        %v767 = vpop.f32.mrb[0].mxu0
        %v768 = vpop.f32.mrb[0].mxu0
        %769 = vdwg.mxu0
        %770 = vmatprep.subr.bf16.mxu0 %v604
        %771 = vmatpush1.bf16.msra.mxu0 %v603
        %772 = vmatprep.subr.bf16.mxu0 %v608
        %773 = vmatpush1.bf16.msra.mxu0 %v607
        %774 = vmatprep.subr.bf16.mxu0 %v612
        %775 = vmatpush1.bf16.msra.mxu0 %v611
        %776 = vmatprep.subr.bf16.mxu0 %v616
        %777 = vmatpush1.bf16.msra.mxu0 %v615
        %778 = vmatprep.subr.bf16.mxu0 %v620
        %779 = vmatpush1.bf16.msra.mxu0 %v619
        %780 = vmatprep.subr.bf16.mxu0 %v624
        %781 = vmatpush1.bf16.msra.mxu0 %v623
        %782 = vmatprep.subr.bf16.mxu0 %v628
        %783 = vmatpush1.bf16.msra.mxu0 %v627
        %784 = vmatprep.subr.bf16.mxu0 %v632
        %785 = vmatpush1.bf16.msra.mxu0 %v631
        %786 = vmatprep.subr.bf16.mxu0 %v636
        %787 = vmatpush1.bf16.msra.mxu0 %v635
        %788 = vmatprep.subr.bf16.mxu0 %v640
        %789 = vmatpush1.bf16.msra.mxu0 %v639
        %790 = vmatprep.subr.bf16.mxu0 %v644
        %791 = vmatpush1.bf16.msra.mxu0 %v643
        %792 = vmatprep.subr.bf16.mxu0 %v648
        %793 = vmatpush1.bf16.msra.mxu0 %v647
        %794 = vmatprep.subr.bf16.mxu0 %v652
        %795 = vmatpush1.bf16.msra.mxu0 %v651
        %796 = vmatprep.subr.bf16.mxu0 %v656
        %797 = vmatpush1.bf16.msra.mxu0 %v655
        %798 = vmatprep.subr.bf16.mxu0 %v660
        %799 = vmatpush1.bf16.msra.mxu0 %v659
        %800 = vmatprep.subr.bf16.mxu0 %v664
        %801 = vmatpush1.bf16.msra.mxu0 %v663
        %802 = vmatprep.mubr.bf16.mxu0 %v344
        %803 = vmatmul.mubr.bf16.gmra.mrb[0].mxu0 %v343
        %v804 = vpop.f32.mrb[0].mxu0
        %v805 = vadd.f32 0.0, %v804
        %v806 = vpop.f32.mrb[0].mxu0
        %v807 = vadd.f32 0.0, %v806
        %v808 = vpop.f32.mrb[0].mxu0
        %v809 = vpop.f32.mrb[0].mxu0
        %810 = vdwg.mxu0
        %v811 = vld [vmem:[%s328] sm:$0xf]
        %v813 = vlaneseq
        %v814 = vshrl.u32 %v813, 7
        %v815 = vsub.s32 0, %v814
        %v816 = vrot.slane %v811, %v815
        %v817 = vlaneseq
        %v818 = vshrl.u32 %v817, 7
        %v819 = vsub.s32 1, %v818
        %v820 = vrot.slane %v811, %v819
        %v821 = vlaneseq
        %v822 = vshrl.u32 %v821, 7
        %v823 = vsub.s32 2, %v822
        %v824 = vrot.slane %v811, %v823
        %v825 = vlaneseq
        %v826 = vshrl.u32 %v825, 7
        %v827 = vsub.s32 3, %v826
        %v828 = vrot.slane %v811, %v827
        %v833 = vmul.f32 %v764, %v816
        %v834 = vmul.f32 %v766, %v820
        %v835 = vmul.f32 %v805, %v824
        %v836 = vmul.f32 %v807, %v828
        %v837 = vpack.c.bf16 %v833, %v833
        %v838 = vpack.c.bf16 %v834, %v834
        %v839 = vpack.c.bf16 %v835, %v835
        %v840 = vpack.c.bf16 %v836, %v836
        %v841 = vld [vmem:[#allocation4] sm:$0xff]
        %v842 = vld [vmem:[#allocation4 + $0x8] sm:$0xff]
        %v843 = vld [vmem:[#allocation4 + $0x10] sm:$0xff]
        %v844 = vld [vmem:[#allocation4 + $0x18] sm:$0xff]
        %v845 = vld [vmem:[#allocation4 + $0x20] sm:$0xff]
        %v846 = vld [vmem:[#allocation4 + $0x28] sm:$0xff]
        %v847 = vld [vmem:[#allocation4 + $0x30] sm:$0xff]
        %v848 = vld [vmem:[#allocation4 + $0x38] sm:$0xff]
        %v849 = vld [vmem:[#allocation4 + $0x40] sm:$0xff]
        %v850 = vld [vmem:[#allocation4 + $0x48] sm:$0xff]
        %v851 = vld [vmem:[#allocation4 + $0x50] sm:$0xff]
        %v852 = vld [vmem:[#allocation4 + $0x58] sm:$0xff]
        %v853 = vld [vmem:[#allocation4 + $0x60] sm:$0xff]
        %v854 = vld [vmem:[#allocation4 + $0x68] sm:$0xff]
        %v855 = vld [vmem:[#allocation4 + $0x70] sm:$0xff]
        %v856 = vld [vmem:[#allocation4 + $0x78] sm:$0xff]
        %v857 = vld [vmem:[#allocation4 + $0x80] sm:$0xff]
        %v858 = vld [vmem:[#allocation4 + $0x88] sm:$0xff]
        %v859 = vld [vmem:[#allocation4 + $0x90] sm:$0xff]
        %v860 = vld [vmem:[#allocation4 + $0x98] sm:$0xff]
        %v861 = vld [vmem:[#allocation4 + $0xa0] sm:$0xff]
        %v862 = vld [vmem:[#allocation4 + $0xa8] sm:$0xff]
        %v863 = vld [vmem:[#allocation4 + $0xb0] sm:$0xff]
        %v864 = vld [vmem:[#allocation4 + $0xb8] sm:$0xff]
        %v865 = vld [vmem:[#allocation4 + $0xc0] sm:$0xff]
        %v866 = vld [vmem:[#allocation4 + $0xc8] sm:$0xff]
        %v867 = vld [vmem:[#allocation4 + $0xd0] sm:$0xff]
        %v868 = vld [vmem:[#allocation4 + $0xd8] sm:$0xff]
        %v869 = vld [vmem:[#allocation4 + $0xe0] sm:$0xff]
        %v870 = vld [vmem:[#allocation4 + $0xe8] sm:$0xff]
        %v871 = vld [vmem:[#allocation4 + $0xf0] sm:$0xff]
        %v872 = vld [vmem:[#allocation4 + $0xf8] sm:$0xff]
        %v873 = vld [vmem:[#allocation4 + $0x100] sm:$0xff]
        %v874 = vld [vmem:[#allocation4 + $0x108] sm:$0xff]
        %v875 = vld [vmem:[#allocation4 + $0x110] sm:$0xff]
        %v876 = vld [vmem:[#allocation4 + $0x118] sm:$0xff]
        %v877 = vld [vmem:[#allocation4 + $0x120] sm:$0xff]
        %v878 = vld [vmem:[#allocation4 + $0x128] sm:$0xff]
        %v879 = vld [vmem:[#allocation4 + $0x130] sm:$0xff]
        %v880 = vld [vmem:[#allocation4 + $0x138] sm:$0xff]
        %v881 = vld [vmem:[#allocation4 + $0x140] sm:$0xff]
        %v882 = vld [vmem:[#allocation4 + $0x148] sm:$0xff]
        %v883 = vld [vmem:[#allocation4 + $0x150] sm:$0xff]
        %v884 = vld [vmem:[#allocation4 + $0x158] sm:$0xff]
        %v885 = vld [vmem:[#allocation4 + $0x160] sm:$0xff]
        %v886 = vld [vmem:[#allocation4 + $0x168] sm:$0xff]
        %v887 = vld [vmem:[#allocation4 + $0x170] sm:$0xff]
        %v888 = vld [vmem:[#allocation4 + $0x178] sm:$0xff]
        %v889 = vld [vmem:[#allocation4 + $0x180] sm:$0xff]
        %v890 = vld [vmem:[#allocation4 + $0x188] sm:$0xff]
        %v891 = vld [vmem:[#allocation4 + $0x190] sm:$0xff]
        %v892 = vld [vmem:[#allocation4 + $0x198] sm:$0xff]
        %v893 = vld [vmem:[#allocation4 + $0x1a0] sm:$0xff]
        %v894 = vld [vmem:[#allocation4 + $0x1a8] sm:$0xff]
        %v895 = vld [vmem:[#allocation4 + $0x1b0] sm:$0xff]
        %v896 = vld [vmem:[#allocation4 + $0x1b8] sm:$0xff]
        %v897 = vld [vmem:[#allocation4 + $0x1c0] sm:$0xff]
        %v898 = vld [vmem:[#allocation4 + $0x1c8] sm:$0xff]
        %v899 = vld [vmem:[#allocation4 + $0x1d0] sm:$0xff]
        %v900 = vld [vmem:[#allocation4 + $0x1d8] sm:$0xff]
        %v901 = vld [vmem:[#allocation4 + $0x1e0] sm:$0xff]
        %v902 = vld [vmem:[#allocation4 + $0x1e8] sm:$0xff]
        %v903 = vld [vmem:[#allocation4 + $0x1f0] sm:$0xff]
        %v904 = vld [vmem:[#allocation4 + $0x1f8] sm:$0xff]
        %v969 = vunpack.c.l.b16 %v841
        %v970 = vunpack.c.h.b16 %v841
        %v971 = vunpack.c.l.b16 %v842
        %v972 = vunpack.c.h.b16 %v842
        %v973 = vunpack.c.l.b16 %v843
        %v974 = vunpack.c.h.b16 %v843
        %v975 = vunpack.c.l.b16 %v844
        %v976 = vunpack.c.h.b16 %v844
        %v977 = vunpack.c.l.b16 %v845
        %v978 = vunpack.c.h.b16 %v845
        %v979 = vunpack.c.l.b16 %v846
        %v980 = vunpack.c.h.b16 %v846
        %v981 = vunpack.c.l.b16 %v847
        %v982 = vunpack.c.h.b16 %v847
        %v983 = vunpack.c.l.b16 %v848
        %v984 = vunpack.c.h.b16 %v848
        %v985 = vunpack.c.l.b16 %v849
        %v986 = vunpack.c.h.b16 %v849
        %v987 = vunpack.c.l.b16 %v850
        %v988 = vunpack.c.h.b16 %v850
        %v989 = vunpack.c.l.b16 %v851
        %v990 = vunpack.c.h.b16 %v851
        %v991 = vunpack.c.l.b16 %v852
        %v992 = vunpack.c.h.b16 %v852
        %v993 = vunpack.c.l.b16 %v853
        %v994 = vunpack.c.h.b16 %v853
        %v995 = vunpack.c.l.b16 %v854
        %v996 = vunpack.c.h.b16 %v854
        %v997 = vunpack.c.l.b16 %v855
        %v998 = vunpack.c.h.b16 %v855
        %v999 = vunpack.c.l.b16 %v856
        %v1000 = vunpack.c.h.b16 %v856
        %v1001 = vunpack.c.l.b16 %v857
        %v1002 = vunpack.c.h.b16 %v857
        %v1003 = vunpack.c.l.b16 %v858
        %v1004 = vunpack.c.h.b16 %v858
        %v1005 = vunpack.c.l.b16 %v859
        %v1006 = vunpack.c.h.b16 %v859
        %v1007 = vunpack.c.l.b16 %v860
        %v1008 = vunpack.c.h.b16 %v860
        %v1009 = vunpack.c.l.b16 %v861
        %v1010 = vunpack.c.h.b16 %v861
        %v1011 = vunpack.c.l.b16 %v862
        %v1012 = vunpack.c.h.b16 %v862
        %v1013 = vunpack.c.l.b16 %v863
        %v1014 = vunpack.c.h.b16 %v863
        %v1015 = vunpack.c.l.b16 %v864
        %v1016 = vunpack.c.h.b16 %v864
        %v1017 = vunpack.c.l.b16 %v865
        %v1018 = vunpack.c.h.b16 %v865
        %v1019 = vunpack.c.l.b16 %v866
        %v1020 = vunpack.c.h.b16 %v866
        %v1021 = vunpack.c.l.b16 %v867
        %v1022 = vunpack.c.h.b16 %v867
        %v1023 = vunpack.c.l.b16 %v868
        %v1024 = vunpack.c.h.b16 %v868
        %v1025 = vunpack.c.l.b16 %v869
        %v1026 = vunpack.c.h.b16 %v869
        %v1027 = vunpack.c.l.b16 %v870
        %v1028 = vunpack.c.h.b16 %v870
        %v1029 = vunpack.c.l.b16 %v871
        %v1030 = vunpack.c.h.b16 %v871
        %v1031 = vunpack.c.l.b16 %v872
        %v1032 = vunpack.c.h.b16 %v872
        %v1033 = vunpack.c.l.b16 %v873
        %v1034 = vunpack.c.h.b16 %v873
        %v1035 = vunpack.c.l.b16 %v874
        %v1036 = vunpack.c.h.b16 %v874
        %v1037 = vunpack.c.l.b16 %v875
        %v1038 = vunpack.c.h.b16 %v875
        %v1039 = vunpack.c.l.b16 %v876
        %v1040 = vunpack.c.h.b16 %v876
        %v1041 = vunpack.c.l.b16 %v877
        %v1042 = vunpack.c.h.b16 %v877
        %v1043 = vunpack.c.l.b16 %v878
        %v1044 = vunpack.c.h.b16 %v878
        %v1045 = vunpack.c.l.b16 %v879
        %v1046 = vunpack.c.h.b16 %v879
        %v1047 = vunpack.c.l.b16 %v880
        %v1048 = vunpack.c.h.b16 %v880
        %v1049 = vunpack.c.l.b16 %v881
        %v1050 = vunpack.c.h.b16 %v881
        %v1051 = vunpack.c.l.b16 %v882
        %v1052 = vunpack.c.h.b16 %v882
        %v1053 = vunpack.c.l.b16 %v883
        %v1054 = vunpack.c.h.b16 %v883
        %v1055 = vunpack.c.l.b16 %v884
        %v1056 = vunpack.c.h.b16 %v884
        %v1057 = vunpack.c.l.b16 %v885
        %v1058 = vunpack.c.h.b16 %v885
        %v1059 = vunpack.c.l.b16 %v886
        %v1060 = vunpack.c.h.b16 %v886
        %v1061 = vunpack.c.l.b16 %v887
        %v1062 = vunpack.c.h.b16 %v887
        %v1063 = vunpack.c.l.b16 %v888
        %v1064 = vunpack.c.h.b16 %v888
        %v1065 = vunpack.c.l.b16 %v889
        %v1066 = vunpack.c.h.b16 %v889
        %v1067 = vunpack.c.l.b16 %v890
        %v1068 = vunpack.c.h.b16 %v890
        %v1069 = vunpack.c.l.b16 %v891
        %v1070 = vunpack.c.h.b16 %v891
        %v1071 = vunpack.c.l.b16 %v892
        %v1072 = vunpack.c.h.b16 %v892
        %v1073 = vunpack.c.l.b16 %v893
        %v1074 = vunpack.c.h.b16 %v893
        %v1075 = vunpack.c.l.b16 %v894
        %v1076 = vunpack.c.h.b16 %v894
        %v1077 = vunpack.c.l.b16 %v895
        %v1078 = vunpack.c.h.b16 %v895
        %v1079 = vunpack.c.l.b16 %v896
        %v1080 = vunpack.c.h.b16 %v896
        %v1081 = vunpack.c.l.b16 %v897
        %v1082 = vunpack.c.h.b16 %v897
        %v1083 = vunpack.c.l.b16 %v898
        %v1084 = vunpack.c.h.b16 %v898
        %v1085 = vunpack.c.l.b16 %v899
        %v1086 = vunpack.c.h.b16 %v899
        %v1087 = vunpack.c.l.b16 %v900
        %v1088 = vunpack.c.h.b16 %v900
        %v1089 = vunpack.c.l.b16 %v901
        %v1090 = vunpack.c.h.b16 %v901
        %v1091 = vunpack.c.l.b16 %v902
        %v1092 = vunpack.c.h.b16 %v902
        %v1093 = vunpack.c.l.b16 %v903
        %v1094 = vunpack.c.h.b16 %v903
        %v1095 = vunpack.c.l.b16 %v904
        %v1096 = vunpack.c.h.b16 %v904
        %v1097 = vpack.c.b16 %v971, %v969
        %v1098 = vpack.c.b16 %v972, %v970
        %v1099 = vpack.c.b16 %v975, %v973
        %v1100 = vpack.c.b16 %v976, %v974
        %v1101 = vpack.c.b16 %v979, %v977
        %v1102 = vpack.c.b16 %v980, %v978
        %v1103 = vpack.c.b16 %v983, %v981
        %v1104 = vpack.c.b16 %v984, %v982
        %v1105 = vpack.c.b16 %v987, %v985
        %v1106 = vpack.c.b16 %v988, %v986
        %v1107 = vpack.c.b16 %v991, %v989
        %v1108 = vpack.c.b16 %v992, %v990
        %v1109 = vpack.c.b16 %v995, %v993
        %v1110 = vpack.c.b16 %v996, %v994
        %v1111 = vpack.c.b16 %v999, %v997
        %v1112 = vpack.c.b16 %v1000, %v998
        %v1113 = vpack.c.b16 %v1003, %v1001
        %v1114 = vpack.c.b16 %v1004, %v1002
        %v1115 = vpack.c.b16 %v1007, %v1005
        %v1116 = vpack.c.b16 %v1008, %v1006
        %v1117 = vpack.c.b16 %v1011, %v1009
        %v1118 = vpack.c.b16 %v1012, %v1010
        %v1119 = vpack.c.b16 %v1015, %v1013
        %v1120 = vpack.c.b16 %v1016, %v1014
        %v1121 = vpack.c.b16 %v1019, %v1017
        %v1122 = vpack.c.b16 %v1020, %v1018
        %v1123 = vpack.c.b16 %v1023, %v1021
        %v1124 = vpack.c.b16 %v1024, %v1022
        %v1125 = vpack.c.b16 %v1027, %v1025
        %v1126 = vpack.c.b16 %v1028, %v1026
        %v1127 = vpack.c.b16 %v1031, %v1029
        %v1128 = vpack.c.b16 %v1032, %v1030
        %v1129 = vpack.c.b16 %v1035, %v1033
        %v1130 = vpack.c.b16 %v1036, %v1034
        %v1131 = vpack.c.b16 %v1039, %v1037
        %v1132 = vpack.c.b16 %v1040, %v1038
        %v1133 = vpack.c.b16 %v1043, %v1041
        %v1134 = vpack.c.b16 %v1044, %v1042
        %v1135 = vpack.c.b16 %v1047, %v1045
        %v1136 = vpack.c.b16 %v1048, %v1046
        %v1137 = vpack.c.b16 %v1051, %v1049
        %v1138 = vpack.c.b16 %v1052, %v1050
        %v1139 = vpack.c.b16 %v1055, %v1053
        %v1140 = vpack.c.b16 %v1056, %v1054
        %v1141 = vpack.c.b16 %v1059, %v1057
        %v1142 = vpack.c.b16 %v1060, %v1058
        %v1143 = vpack.c.b16 %v1063, %v1061
        %v1144 = vpack.c.b16 %v1064, %v1062
        %v1145 = vpack.c.b16 %v1067, %v1065
        %v1146 = vpack.c.b16 %v1068, %v1066
        %v1147 = vpack.c.b16 %v1071, %v1069
        %v1148 = vpack.c.b16 %v1072, %v1070
        %v1149 = vpack.c.b16 %v1075, %v1073
        %v1150 = vpack.c.b16 %v1076, %v1074
        %v1151 = vpack.c.b16 %v1079, %v1077
        %v1152 = vpack.c.b16 %v1080, %v1078
        %v1153 = vpack.c.b16 %v1083, %v1081
        %v1154 = vpack.c.b16 %v1084, %v1082
        %v1155 = vpack.c.b16 %v1087, %v1085
        %v1156 = vpack.c.b16 %v1088, %v1086
        %v1157 = vpack.c.b16 %v1091, %v1089
        %v1158 = vpack.c.b16 %v1092, %v1090
        %v1159 = vpack.c.b16 %v1095, %v1093
        %v1160 = vpack.c.b16 %v1096, %v1094
        %1225 = vmatprep.subr.bf16.mxu0 %v1098
        %1226 = vmatpush1.bf16.msra.mxu0 %v1097
        %1227 = vmatprep.subr.bf16.mxu0 %v1100
        %1228 = vmatpush1.bf16.msra.mxu0 %v1099
        %1229 = vmatprep.subr.bf16.mxu0 %v1102
        %1230 = vmatpush1.bf16.msra.mxu0 %v1101
        %1231 = vmatprep.subr.bf16.mxu0 %v1104
        %1232 = vmatpush1.bf16.msra.mxu0 %v1103
        %1233 = vmatprep.subr.bf16.mxu0 %v1106
        %1234 = vmatpush1.bf16.msra.mxu0 %v1105
        %1235 = vmatprep.subr.bf16.mxu0 %v1108
        %1236 = vmatpush1.bf16.msra.mxu0 %v1107
        %1237 = vmatprep.subr.bf16.mxu0 %v1110
        %1238 = vmatpush1.bf16.msra.mxu0 %v1109
        %1239 = vmatprep.subr.bf16.mxu0 %v1112
        %1240 = vmatpush1.bf16.msra.mxu0 %v1111
        %1241 = vmatprep.subr.bf16.mxu0 %v1114
        %1242 = vmatpush1.bf16.msra.mxu0 %v1113
        %1243 = vmatprep.subr.bf16.mxu0 %v1116
        %1244 = vmatpush1.bf16.msra.mxu0 %v1115
        %1245 = vmatprep.subr.bf16.mxu0 %v1118
        %1246 = vmatpush1.bf16.msra.mxu0 %v1117
        %1247 = vmatprep.subr.bf16.mxu0 %v1120
        %1248 = vmatpush1.bf16.msra.mxu0 %v1119
        %1249 = vmatprep.subr.bf16.mxu0 %v1122
        %1250 = vmatpush1.bf16.msra.mxu0 %v1121
        %1251 = vmatprep.subr.bf16.mxu0 %v1124
        %1252 = vmatpush1.bf16.msra.mxu0 %v1123
        %1253 = vmatprep.subr.bf16.mxu0 %v1126
        %1254 = vmatpush1.bf16.msra.mxu0 %v1125
        %1255 = vmatprep.subr.bf16.mxu0 %v1128
        %1256 = vmatpush1.bf16.msra.mxu0 %v1127
        %1257 = vmatprep.mubr.bf16.mxu0 %v838
        %1258 = vmatmul.mubr.bf16.gmra.mrb[0].mxu0 %v837
        %v1259 = vpop.f32.mrb[0].mxu0
        %v1260 = vadd.f32 0.0, %v1259
        %v1261 = vpop.f32.mrb[0].mxu0
        %v1262 = vadd.f32 0.0, %v1261
        %v1263 = vpop.f32.mrb[0].mxu0
        %v1264 = vpop.f32.mrb[0].mxu0
        %1265 = vdwg.mxu0
        %1266 = vmatprep.subr.bf16.mxu0 %v1130
        %1267 = vmatpush1.bf16.msra.mxu0 %v1129
        %1268 = vmatprep.subr.bf16.mxu0 %v1132
        %1269 = vmatpush1.bf16.msra.mxu0 %v1131
        %1270 = vmatprep.subr.bf16.mxu0 %v1134
        %1271 = vmatpush1.bf16.msra.mxu0 %v1133
        %1272 = vmatprep.subr.bf16.mxu0 %v1136
        %1273 = vmatpush1.bf16.msra.mxu0 %v1135
        %1274 = vmatprep.subr.bf16.mxu0 %v1138
        %1275 = vmatpush1.bf16.msra.mxu0 %v1137
        %1276 = vmatprep.subr.bf16.mxu0 %v1140
        %1277 = vmatpush1.bf16.msra.mxu0 %v1139
        %1278 = vmatprep.subr.bf16.mxu0 %v1142
        %1279 = vmatpush1.bf16.msra.mxu0 %v1141
        %1280 = vmatprep.subr.bf16.mxu0 %v1144
        %1281 = vmatpush1.bf16.msra.mxu0 %v1143
        %1282 = vmatprep.subr.bf16.mxu0 %v1146
        %1283 = vmatpush1.bf16.msra.mxu0 %v1145
        %1284 = vmatprep.subr.bf16.mxu0 %v1148
        %1285 = vmatpush1.bf16.msra.mxu0 %v1147
        %1286 = vmatprep.subr.bf16.mxu0 %v1150
        %1287 = vmatpush1.bf16.msra.mxu0 %v1149
        %1288 = vmatprep.subr.bf16.mxu0 %v1152
        %1289 = vmatpush1.bf16.msra.mxu0 %v1151
        %1290 = vmatprep.subr.bf16.mxu0 %v1154
        %1291 = vmatpush1.bf16.msra.mxu0 %v1153
        %1292 = vmatprep.subr.bf16.mxu0 %v1156
        %1293 = vmatpush1.bf16.msra.mxu0 %v1155
        %1294 = vmatprep.subr.bf16.mxu0 %v1158
        %1295 = vmatpush1.bf16.msra.mxu0 %v1157
        %1296 = vmatprep.subr.bf16.mxu0 %v1160
        %1297 = vmatpush1.bf16.msra.mxu0 %v1159
        %1298 = vmatprep.mubr.bf16.mxu0 %v840
        %1299 = vmatmul.mubr.bf16.gmra.mrb[0].mxu0 %v839
        %v1300 = vpop.f32.mrb[0].mxu0
        %v1301 = vadd.f32 %v1260, %v1300
        %v1302 = vpop.f32.mrb[0].mxu0
        %v1303 = vadd.f32 %v1262, %v1302
        %v1304 = vpop.f32.mrb[0].mxu0
        %v1305 = vpop.f32.mrb[0].mxu0
        %1306 = vdwg.mxu0
        %v1307 = vmax.f32 %v1301, 0.0
        %v1308 = vmax.f32 %v1303, 0.0
        %v1309 = vmin.f32 %v1307, 1.0
        %v1310 = vmin.f32 %v1308, 1.0
        %v1311 = vld [vmem:[%s4] sm:$0x7]
        %v1312 = vld [vmem:[%s5] sm:$0x7]
        %1314 = vset.pattern.permute.xlu0 0
        %1315 = vperm.xlu0 %1314, %v1311
        %v1316 = vpop.permute.xlu0 %1315
        %v1318 = vsub.f32 %v1309, %v1316
        %v1319 = vsub.f32 %v1310, %v1316
        %1321 = vset.pattern.permute.xlu0 0
        %1322 = vperm.xlu0 %1321, %v1312
        %v1323 = vpop.permute.xlu0 %1322
        %v1325 = vmul.f32 %v1318, %v1323
        %v1326 = vmul.f32 %v1319, %v1323
        %v1329 = vcombine.low %v1325, %v1326
        %1331 = vst [vmem:[%s333] sm:$0x77] %v1329
        %v1333 = vunpack.c.l.s4 839922192
        %v1334 = vunpack.c.0.s8 %v1333
        %v1335 = vlaneseq
        %v1336 = vshrl.u32 %v1335, 7
        %v1337 = vsub.s32 %v1334, %v1336
        %v1338 = vrot.slane %v1316, %v1337
        %v1340 = vsub.f32 %v339, %v1338
        %v1342 = vunpack.c.l.s4 839922192
        %v1343 = vunpack.c.0.s8 %v1342
        %v1344 = vlaneseq
        %v1345 = vshrl.u32 %v1344, 7
        %v1346 = vsub.s32 %v1343, %v1345
        %v1347 = vrot.slane %v1323, %v1346
        %v1349 = vmul.f32 %v1340, %v1347
        %1350 = vst [vmem:[%s338] sm:$0x77] %v1349
        %p1351 = scmp.lt.s32.totalorder %s21, 1
        %s1352 = scalar_select %p1351, %s21, 1
        %s1353 = smul.addr %s1352, 2
        %s1354 = smul.addr %s1353, 4
        %s1355 = scalar_lea.vmem %s6, %s1354
        %p1356 = scmp.lt.s32.totalorder %s21, 1
        %s1357 = scalar_select %p1356, %s21, 1
        %s1358 = smul.addr %s1357, 2
        %s1359 = smul.addr %s1358, 4
        %s1360 = scalar_lea.vmem %s7, %s1359
        // Predicated region
        $region53: #{mfm_mask_forward.3} parent=43 // pred_check
          %p1361 = pneg %p175
        $region54: #{mfm_mask_forward.3} parent=43 // pred_check_branch
          %1363 = sbr.rel (%p1361) target = $region56
        $region55: #{mfm_mask_forward.3} parent=43 // pred_region
          _
        $region56: #{mfm_mask_forward.3} parent=43 // pred_fallthru
          _
        // Predicated region
        $region57: #{mfm_mask_forward.3} parent=43 // pred_check
          %p1364 = pneg %p201
        $region58: #{mfm_mask_forward.3} parent=43 // pred_check_branch
          %1366 = sbr.rel (%p1364) target = $region60
        $region59: #{mfm_mask_forward.3} parent=43 // pred_region
          _
        $region60: #{mfm_mask_forward.3} parent=43 // pred_fallthru
          _
      $region44: #{mfm_mask_forward.3} parent=5 // pred_fallthru
        _
      %p1367 = scmp.le.s32.totalorder 2, %s16
      // Predicated region
      $region61: #{mfm_mask_forward.3} parent=5 // pred_check
        %p1368 = pneg %p1367
      $region62: #{mfm_mask_forward.3} parent=5 // pred_check_branch
        %1370 = sbr.rel (%p1368) target = $region64
      $region63: #{mfm_mask_forward.3} parent=5 // pred_region
        %s1371 = ssub.s32 %s16, 2
        // Predicated region
        $region65: #{mfm_mask_forward.3} parent=63 // pred_check
          %p1372 = pneg %p181
        $region66: #{mfm_mask_forward.3} parent=63 // pred_check_branch
          %1374 = sbr.rel (%p1372) target = $region68
        $region67: #{mfm_mask_forward.3} parent=63 // pred_region
          %p1375 = scmp.lt.s32.totalorder %s22, 1
          %s1376 = scalar_select %p1375, %s22, 1
          %s1377 = smul.addr %s1376, 2
          %s1378 = smul.addr %s1377, 4
          %s1379 = scalar_lea.vmem %s6, %s1378
        $region68: #{mfm_mask_forward.3} parent=63 // pred_fallthru
          _
        // Predicated region
        $region69: #{mfm_mask_forward.3} parent=63 // pred_check
          %p1380 = pneg %p207
        $region70: #{mfm_mask_forward.3} parent=63 // pred_check_branch
          %1382 = sbr.rel (%p1380) target = $region72
        $region71: #{mfm_mask_forward.3} parent=63 // pred_region
          %p1383 = scmp.lt.s32.totalorder %s22, 1
          %s1384 = scalar_select %p1383, %s22, 1
          %s1385 = smul.addr %s1384, 2
          %s1386 = smul.addr %s1385, 4
          %s1387 = scalar_lea.vmem %s7, %s1386
        $region72: #{mfm_mask_forward.3} parent=63 // pred_fallthru
          _
      $region64: #{mfm_mask_forward.3} parent=5 // pred_fallthru
        _
    $region6: #{mfm_mask_forward.3} parent=1 // loop_footer
      %s20 = sadd.s32 1, %s16
    $region7: #{mfm_mask_forward.3} parent=1 // loop_footer_branch
      %15 = sbr.rel target = $region3
    $region8: #{mfm_mask_forward.3} parent=1 // loop_exit
      _
    %1388 = vsyncpa [#allocation3], 1
    %s1389 = scalar_lea.sflag [#allocation3], 1
    %1390 = vsyncpa %s1389, 1
    %1391 = vsyncpa [#allocation5], 1

// kernel: mfm_mask_forward.5
$region0: #{mfm_mask_forward.5}
  #allocation0 [shape = 'u32[]', space=smem, size = 0x4, offset = 0x4, fixed_abs, tag = 'smem constant byte address 0x4 - core index']
  #allocation1 [shape = 'u32[144,128]{1,0:T(1,128)}', space=vmem, size = 0x12000, scoped, tag = 'internal scratch']
  %s0 = inlined_call_operand.vmem [shape: f32[2,3,256], index: 0, kind: input, shape index: {}]
  %s1 = inlined_call_operand.vmem [shape: f32[2,3,256], index: 1, kind: input, shape index: {}]
  %s2 = inlined_call_operand.vmem [shape: f32[2,1,512], index: 2, kind: input, shape index: {}]
  %s3 = inlined_call_operand.vmem [shape: bf16[256,512], index: 3, kind: input, shape index: {}]
  %s4 = inlined_call_operand.vmem [shape: f32[3,2], index: 4, kind: input, shape index: {}]
  %s5 = inlined_call_operand.vmem [shape: f32[1,2], index: 5, kind: input, shape index: {}]
  %s6 = inlined_call_operand.vmem [shape: f32[2,1,1], index: 6, kind: output, shape index: {0}]
  %s7 = inlined_call_operand.vmem [shape: f32[2,1,1], index: 7, kind: output, shape index: {1}]
  %s8 = inlined_call_operand.vmem [shape: f32[2,1,2], index: 8, kind: output, shape index: {2}]
  %9 = xla_tuple %s6, %s7, %s8
  %s10 = sld [smem:[#allocation0]]
  $region73: #{mfm_mask_forward.5} parent=0
    _
  %s12 = ssub.s32 1, %s10
  %s13 = scalar_select 0, %s12, %s10
  loop: start=0, step=1, limit=4
  $region2: #{mfm_mask_forward.5} parent=0 // loop_pre_header
    _
  $region3: #{mfm_mask_forward.5} parent=0 // loop_header
    %s15 = sphi 0, %s19
    %p16 = scmp.ge.s32.totalorder %s15, 4
    %s25 = sphi 0, %s27
    %s28 = sphi 0, %s25
    %s29 = sphi 0, %s28
    %s45 = sphi 0, %s29
    %s51 = sphi 0, %s53
    %s54 = sphi 0, %s51
    %s55 = sphi 0, %s54
    %s71 = sphi 0, %s55
    %s77 = sphi 0, %s79
    %s80 = sphi 0, %s77
    %s81 = sphi 0, %s80
    %s97 = sphi 0, %s81
    %s101 = sphi 0, %s101
    %s103 = sphi 0, %s101
    %s104 = sphi 0, %s103
    %s118 = sphi 0, %s104
    %s122 = sphi 0, %s122
    %s124 = sphi 0, %s122
    %s125 = sphi 0, %s124
    %s139 = sphi 0, %s125
    %s143 = sphi 0, %s143
    %s145 = sphi 0, %s143
    %s146 = sphi 0, %s145
    %s160 = sphi 0, %s146
    %s166 = sphi 0, %s168
    %s169 = sphi 0, %s166
    %s170 = sphi 0, %s169
    %s186 = sphi 0, %s170
    %s192 = sphi 0, %s194
    %s195 = sphi 0, %s192
    %s196 = sphi 0, %s195
    %s212 = sphi 0, %s196
    %s218 = sphi 0, %s220
    %s221 = sphi 0, %s218
    %s222 = sphi 0, %s221
    %s238 = sphi 0, %s222
  $region4: #{mfm_mask_forward.5} parent=0 // loop_header_branch
    %18 = sbr.rel (%p16) target = $region8
  $region5: #{mfm_mask_forward.5} parent=0 // loop_body
    %s20 = ssub.s32 %s15, 1
    %s21 = ssub.s32 %s15, 2
    %s22 = sadd.s32 %s15, 1
    %s23 = ssub.s32 %s15, %s22
    %p24 = scmp.eq.s32.totalorder %s23, 0
    %s26 = sadd.s32 %s25, 1
    %s27 = scalar_select %p24, %s25, %s26
    %p30 = pneg %p24
    %p31 = scmp.eq.s32.totalorder %s15, 1
    %p32 = por %p30, %p31
    %p33 = scmp.ne.s32.totalorder %s25, %s28
    %p34 = scmp.eq.s32.totalorder %s15, 0
    %p35 = por %p33, %p34
    %p36 = scmp.ne.s32.totalorder %s25, %s28
    %p37 = scmp.eq.s32.totalorder %s20, 1
    %p38 = por %p36, %p37
    %p39 = scmp.ne.s32.totalorder %s28, %s29
    %p40 = scmp.eq.s32.totalorder %s20, 0
    %p41 = por %p39, %p40
    %p42 = scmp.ne.s32.totalorder %s28, %s29
    %p43 = scmp.eq.s32.totalorder %s21, 1
    %p44 = por %p42, %p43
    %p46 = scmp.ne.s32.totalorder %s29, %s45
    %p47 = scmp.eq.s32.totalorder %s21, 0
    %p48 = por %p46, %p47
    %s49 = ssub.s32 %s15, %s22
    %p50 = scmp.eq.s32.totalorder %s49, 0
    %s52 = sadd.s32 %s51, 1
    %s53 = scalar_select %p50, %s51, %s52
    %p56 = pneg %p50
    %p57 = scmp.eq.s32.totalorder %s15, 1
    %p58 = por %p56, %p57
    %p59 = scmp.ne.s32.totalorder %s51, %s54
    %p60 = scmp.eq.s32.totalorder %s15, 0
    %p61 = por %p59, %p60
    %p62 = scmp.ne.s32.totalorder %s51, %s54
    %p63 = scmp.eq.s32.totalorder %s20, 1
    %p64 = por %p62, %p63
    %p65 = scmp.ne.s32.totalorder %s54, %s55
    %p66 = scmp.eq.s32.totalorder %s20, 0
    %p67 = por %p65, %p66
    %p68 = scmp.ne.s32.totalorder %s54, %s55
    %p69 = scmp.eq.s32.totalorder %s21, 1
    %p70 = por %p68, %p69
    %p72 = scmp.ne.s32.totalorder %s55, %s71
    %p73 = scmp.eq.s32.totalorder %s21, 0
    %p74 = por %p72, %p73
    %s75 = ssub.s32 %s15, %s22
    %p76 = scmp.eq.s32.totalorder %s75, 0
    %s78 = sadd.s32 %s77, 1
    %s79 = scalar_select %p76, %s77, %s78
    %p82 = pneg %p76
    %p83 = scmp.eq.s32.totalorder %s15, 1
    %p84 = por %p82, %p83
    %p85 = scmp.ne.s32.totalorder %s77, %s80
    %p86 = scmp.eq.s32.totalorder %s15, 0
    %p87 = por %p85, %p86
    %p88 = scmp.ne.s32.totalorder %s77, %s80
    %p89 = scmp.eq.s32.totalorder %s20, 1
    %p90 = por %p88, %p89
    %p91 = scmp.ne.s32.totalorder %s80, %s81
    %p92 = scmp.eq.s32.totalorder %s20, 0
    %p93 = por %p91, %p92
    %p94 = scmp.ne.s32.totalorder %s80, %s81
    %p95 = scmp.eq.s32.totalorder %s21, 1
    %p96 = por %p94, %p95
    %p98 = scmp.ne.s32.totalorder %s81, %s97
    %p99 = scmp.eq.s32.totalorder %s21, 0
    %p100 = por %p98, %p99
    %s102 = sadd.s32 %s101, 1
    %p105 = scmp.eq.s32.totalorder %s15, 1
    %p106 = scmp.ne.s32.totalorder %s101, %s103
    %p107 = scmp.eq.s32.totalorder %s15, 0
    %p108 = por %p106, %p107
    %p109 = scmp.ne.s32.totalorder %s101, %s103
    %p110 = scmp.eq.s32.totalorder %s20, 1
    %p111 = por %p109, %p110
    %p112 = scmp.ne.s32.totalorder %s103, %s104
    %p113 = scmp.eq.s32.totalorder %s20, 0
    %p114 = por %p112, %p113
    %p115 = scmp.ne.s32.totalorder %s103, %s104
    %p116 = scmp.eq.s32.totalorder %s21, 1
    %p117 = por %p115, %p116
    %p119 = scmp.ne.s32.totalorder %s104, %s118
    %p120 = scmp.eq.s32.totalorder %s21, 0
    %p121 = por %p119, %p120
    %s123 = sadd.s32 %s122, 1
    %p126 = scmp.eq.s32.totalorder %s15, 1
    %p127 = scmp.ne.s32.totalorder %s122, %s124
    %p128 = scmp.eq.s32.totalorder %s15, 0
    %p129 = por %p127, %p128
    %p130 = scmp.ne.s32.totalorder %s122, %s124
    %p131 = scmp.eq.s32.totalorder %s20, 1
    %p132 = por %p130, %p131
    %p133 = scmp.ne.s32.totalorder %s124, %s125
    %p134 = scmp.eq.s32.totalorder %s20, 0
    %p135 = por %p133, %p134
    %p136 = scmp.ne.s32.totalorder %s124, %s125
    %p137 = scmp.eq.s32.totalorder %s21, 1
    %p138 = por %p136, %p137
    %p140 = scmp.ne.s32.totalorder %s125, %s139
    %p141 = scmp.eq.s32.totalorder %s21, 0
    %p142 = por %p140, %p141
    %s144 = sadd.s32 %s143, 1
    %p147 = scmp.eq.s32.totalorder %s15, 1
    %p148 = scmp.ne.s32.totalorder %s143, %s145
    %p149 = scmp.eq.s32.totalorder %s15, 0
    %p150 = por %p148, %p149
    %p151 = scmp.ne.s32.totalorder %s143, %s145
    %p152 = scmp.eq.s32.totalorder %s20, 1
    %p153 = por %p151, %p152
    %p154 = scmp.ne.s32.totalorder %s145, %s146
    %p155 = scmp.eq.s32.totalorder %s20, 0
    %p156 = por %p154, %p155
    %p157 = scmp.ne.s32.totalorder %s145, %s146
    %p158 = scmp.eq.s32.totalorder %s21, 1
    %p159 = por %p157, %p158
    %p161 = scmp.ne.s32.totalorder %s146, %s160
    %p162 = scmp.eq.s32.totalorder %s21, 0
    %p163 = por %p161, %p162
    %s164 = ssub.s32 %s15, %s22
    %p165 = scmp.eq.s32.totalorder %s164, 0
    %s167 = sadd.s32 %s166, 1
    %s168 = scalar_select %p165, %s166, %s167
    %p171 = pneg %p165
    %p172 = scmp.eq.s32.totalorder %s15, 1
    %p173 = por %p171, %p172
    %p174 = scmp.ne.s32.totalorder %s166, %s169
    %p175 = scmp.eq.s32.totalorder %s15, 0
    %p176 = por %p174, %p175
    %p177 = scmp.ne.s32.totalorder %s166, %s169
    %p178 = scmp.eq.s32.totalorder %s20, 1
    %p179 = por %p177, %p178
    %p180 = scmp.ne.s32.totalorder %s169, %s170
    %p181 = scmp.eq.s32.totalorder %s20, 0
    %p182 = por %p180, %p181
    %p183 = scmp.ne.s32.totalorder %s169, %s170
    %p184 = scmp.eq.s32.totalorder %s21, 1
    %p185 = por %p183, %p184
    %p187 = scmp.ne.s32.totalorder %s170, %s186
    %p188 = scmp.eq.s32.totalorder %s21, 0
    %p189 = por %p187, %p188
    %s190 = ssub.s32 %s15, %s22
    %p191 = scmp.eq.s32.totalorder %s190, 0
    %s193 = sadd.s32 %s192, 1
    %s194 = scalar_select %p191, %s192, %s193
    %p197 = pneg %p191
    %p198 = scmp.eq.s32.totalorder %s15, 1
    %p199 = por %p197, %p198
    %p200 = scmp.ne.s32.totalorder %s192, %s195
    %p201 = scmp.eq.s32.totalorder %s15, 0
    %p202 = por %p200, %p201
    %p203 = scmp.ne.s32.totalorder %s192, %s195
    %p204 = scmp.eq.s32.totalorder %s20, 1
    %p205 = por %p203, %p204
    %p206 = scmp.ne.s32.totalorder %s195, %s196
    %p207 = scmp.eq.s32.totalorder %s20, 0
    %p208 = por %p206, %p207
    %p209 = scmp.ne.s32.totalorder %s195, %s196
    %p210 = scmp.eq.s32.totalorder %s21, 1
    %p211 = por %p209, %p210
    %p213 = scmp.ne.s32.totalorder %s196, %s212
    %p214 = scmp.eq.s32.totalorder %s21, 0
    %p215 = por %p213, %p214
    %s216 = ssub.s32 %s15, %s22
    %p217 = scmp.eq.s32.totalorder %s216, 0
    %s219 = sadd.s32 %s218, 1
    %s220 = scalar_select %p217, %s218, %s219
    %p223 = pneg %p217
    %p224 = scmp.eq.s32.totalorder %s15, 1
    %p225 = por %p223, %p224
    %p226 = scmp.ne.s32.totalorder %s218, %s221
    %p227 = scmp.eq.s32.totalorder %s15, 0
    %p228 = por %p226, %p227
    %p229 = scmp.ne.s32.totalorder %s218, %s221
    %p230 = scmp.eq.s32.totalorder %s20, 1
    %p231 = por %p229, %p230
    %p232 = scmp.ne.s32.totalorder %s221, %s222
    %p233 = scmp.eq.s32.totalorder %s20, 0
    %p234 = por %p232, %p233
    %p235 = scmp.ne.s32.totalorder %s221, %s222
    %p236 = scmp.eq.s32.totalorder %s21, 1
    %p237 = por %p235, %p236
    %p239 = scmp.ne.s32.totalorder %s222, %s238
    %p240 = scmp.eq.s32.totalorder %s21, 0
    %p241 = por %p239, %p240
    %p242 = scmp.le.s32.totalorder 1, %s15
    %p243 = scmp.lt.s32.totalorder %s15, 3
    %p244 = pnand %p242, %p243
    %p245 = pneg %p244
    // Predicated region
    $region9: #{mfm_mask_forward.5} parent=5 // pred_check
      _
    $region10: #{mfm_mask_forward.5} parent=5 // pred_check_branch
      %247 = sbr.rel (%p244) target = $region12
    $region11: #{mfm_mask_forward.5} parent=5 // pred_region
      %s248 = ssub.s32 %s15, 1
      // Predicated region
      $region13: #{mfm_mask_forward.5} parent=11 // pred_check
        %p249 = pneg %p114
      $region14: #{mfm_mask_forward.5} parent=11 // pred_check_branch
        %251 = sbr.rel (%p249) target = $region16
      $region15: #{mfm_mask_forward.5} parent=11 // pred_region
        _
      $region16: #{mfm_mask_forward.5} parent=11 // pred_fallthru
        _
      // Predicated region
      $region17: #{mfm_mask_forward.5} parent=11 // pred_check
        %p252 = pneg %p135
      $region18: #{mfm_mask_forward.5} parent=11 // pred_check_branch
        %254 = sbr.rel (%p252) target = $region20
      $region19: #{mfm_mask_forward.5} parent=11 // pred_region
        _
      $region20: #{mfm_mask_forward.5} parent=11 // pred_fallthru
        _
      // Predicated region
      $region21: #{mfm_mask_forward.5} parent=11 // pred_check
        %p255 = pneg %p156
      $region22: #{mfm_mask_forward.5} parent=11 // pred_check_branch
        %257 = sbr.rel (%p255) target = $region24
      $region23: #{mfm_mask_forward.5} parent=11 // pred_region
        _
      $region24: #{mfm_mask_forward.5} parent=11 // pred_fallthru
        _
    $region12: #{mfm_mask_forward.5} parent=5 // pred_fallthru
      _
    %p258 = scmp.lt.s32.totalorder %s15, 2
    // Predicated region
    $region25: #{mfm_mask_forward.5} parent=5 // pred_check
      %p259 = pneg %p258
    $region26: #{mfm_mask_forward.5} parent=5 // pred_check_branch
      %261 = sbr.rel (%p259) target = $region28
    $region27: #{mfm_mask_forward.5} parent=5 // pred_region
      // Predicated region
      $region29: #{mfm_mask_forward.5} parent=27 // pred_check
        %p262 = pneg %p35
      $region30: #{mfm_mask_forward.5} parent=27 // pred_check_branch
        %264 = sbr.rel (%p262) target = $region32
      $region31: #{mfm_mask_forward.5} parent=27 // pred_region
        %p265 = scmp.lt.s32.totalorder %s15, 1
        %s266 = scalar_select %p265, %s15, 1
        %s267 = smul.addr %s266, 2
        %s268 = smul.addr %s267, 4
        %s269 = scalar_lea.vmem %s0, %s268
      $region32: #{mfm_mask_forward.5} parent=27 // pred_fallthru
        _
      // Predicated region
      $region33: #{mfm_mask_forward.5} parent=27 // pred_check
        %p270 = pneg %p61
      $region34: #{mfm_mask_forward.5} parent=27 // pred_check_branch
        %272 = sbr.rel (%p270) target = $region36
      $region35: #{mfm_mask_forward.5} parent=27 // pred_region
        %p273 = scmp.lt.s32.totalorder %s15, 1
        %s274 = scalar_select %p273, %s15, 1
        %s275 = smul.addr %s274, 2
        %s276 = smul.addr %s275, 4
        %s277 = scalar_lea.vmem %s1, %s276
      $region36: #{mfm_mask_forward.5} parent=27 // pred_fallthru
        _
      // Predicated region
      $region37: #{mfm_mask_forward.5} parent=27 // pred_check
        %p278 = pneg %p87
      $region38: #{mfm_mask_forward.5} parent=27 // pred_check_branch
        %280 = sbr.rel (%p278) target = $region40
      $region39: #{mfm_mask_forward.5} parent=27 // pred_region
        %p281 = scmp.lt.s32.totalorder %s15, 1
        %s282 = scalar_select %p281, %s15, 1
        %s283 = smul.addr %s282, 4
        %s284 = scalar_lea.vmem %s2, %s283
      $region40: #{mfm_mask_forward.5} parent=27 // pred_fallthru
        _
    $region28: #{mfm_mask_forward.5} parent=5 // pred_fallthru
      _
    %p285 = scmp.le.s32.totalorder 1, %s15
    %p286 = scmp.lt.s32.totalorder %s15, 3
    %p287 = pnand %p285, %p286
    %p288 = pneg %p287
    // Predicated region
    $region41: #{mfm_mask_forward.5} parent=5 // pred_check
      _
    $region42: #{mfm_mask_forward.5} parent=5 // pred_check_branch
      %290 = sbr.rel (%p287) target = $region44
    $region43: #{mfm_mask_forward.5} parent=5 // pred_region
      %s291 = ssub.s32 %s15, 1
      %p292 = scmp.lt.s32.totalorder %s20, 1
      %s293 = scalar_select %p292, %s20, 1
      %s294 = smul.addr %s293, 2
      %s295 = smul.addr %s294, 4
      %s296 = scalar_lea.vmem %s0, %s295
      %p297 = pneg %p41
      %p298 = pneg %p38
      %p299 = scmp.lt.s32.totalorder %s20, 1
      %s300 = scalar_select %p299, %s20, 1
      %s301 = smul.addr %s300, 2
      %s302 = smul.addr %s301, 4
      %s303 = scalar_lea.vmem %s1, %s302
      %p304 = pneg %p67
      %p305 = pneg %p64
      %p306 = scmp.lt.s32.totalorder %s20, 1
      %s307 = scalar_select %p306, %s20, 1
      %s308 = smul.addr %s307, 4
      %s309 = scalar_lea.vmem %s2, %s308
      %p310 = pneg %p93
      %p311 = pneg %p90
      %p312 = pneg %p114
      %p313 = pneg %p111
      %p314 = pneg %p135
      %p315 = pneg %p132
      %p316 = pneg %p156
      %p317 = pneg %p153
      %p318 = pneg %p182
      %p319 = pneg %p179
      %p320 = scmp.lt.s32.totalorder %s20, 1
      %s321 = scalar_select %p320, %s20, 1
      %s322 = scalar_lea.vmem %s6, %s321
      %p323 = pneg %p208
      %p324 = pneg %p205
      %p325 = scmp.lt.s32.totalorder %s20, 1
      %s326 = scalar_select %p325, %s20, 1
      %s327 = scalar_lea.vmem %s7, %s326
      %p328 = pneg %p234
      %p329 = pneg %p231
      %p330 = scmp.lt.s32.totalorder %s20, 1
      %s331 = scalar_select %p330, %s20, 1
      %s332 = scalar_lea.vmem %s8, %s331
      %p333 = scmp.lt.s32.totalorder %s20, 1
      %s334 = scalar_select %p333, %s20, 1
      %s335 = smul.addr %s334, 2
      %s336 = smul.addr %s335, 4
      %s337 = scalar_lea.vmem %s0, %s336
      %p338 = scmp.lt.s32.totalorder %s20, 1
      %s339 = scalar_select %p338, %s20, 1
      %s340 = smul.addr %s339, 2
      %s341 = smul.addr %s340, 4
      %s342 = scalar_lea.vmem %s1, %s341
      %p343 = scmp.lt.s32.totalorder %s20, 1
      %s344 = scalar_select %p343, %s20, 1
      %s345 = smul.addr %s344, 4
      %s346 = scalar_lea.vmem %s2, %s345
      %p347 = scmp.lt.s32.totalorder %s20, 1
      %s348 = scalar_select %p347, %s20, 1
      %s349 = scalar_lea.vmem %s6, %s348
      %p350 = scmp.lt.s32.totalorder %s20, 1
      %s351 = scalar_select %p350, %s20, 1
      %s352 = scalar_lea.vmem %s7, %s351
      %p353 = scmp.lt.s32.totalorder %s20, 1
      %s354 = scalar_select %p353, %s20, 1
      %s355 = scalar_lea.vmem %s8, %s354
      %v356 = vld [vmem:[%s337] sm:$0x77]
      %v357 = vld [vmem:[%s342] sm:$0x77]
      %v358 = vsub.f32 %v356, %v357
      %v360 = vcombine.high %v358, %v358
      %v362 = vpack.c.bf16 %v358, %v358
      %v363 = vpack.c.bf16 %v360, %v360
      %v364 = vld [vmem:[%s3] sm:$0xff]
      %v365 = vld [vmem:[%s3 + $0x8] sm:$0xff]
      %v366 = vld [vmem:[%s3 + $0x10] sm:$0xff]
      %v367 = vld [vmem:[%s3 + $0x18] sm:$0xff]
      %v368 = vld [vmem:[%s3 + $0x20] sm:$0xff]
      %v369 = vld [vmem:[%s3 + $0x28] sm:$0xff]
      %v370 = vld [vmem:[%s3 + $0x30] sm:$0xff]
      %v371 = vld [vmem:[%s3 + $0x38] sm:$0xff]
      %v372 = vld [vmem:[%s3 + $0x40] sm:$0xff]
      %v373 = vld [vmem:[%s3 + $0x48] sm:$0xff]
      %v374 = vld [vmem:[%s3 + $0x50] sm:$0xff]
      %v375 = vld [vmem:[%s3 + $0x58] sm:$0xff]
      %v376 = vld [vmem:[%s3 + $0x60] sm:$0xff]
      %v377 = vld [vmem:[%s3 + $0x68] sm:$0xff]
      %v378 = vld [vmem:[%s3 + $0x70] sm:$0xff]
      %v379 = vld [vmem:[%s3 + $0x78] sm:$0xff]
      %v380 = vld [vmem:[%s3 + $0x80] sm:$0xff]
      %v381 = vld [vmem:[%s3 + $0x88] sm:$0xff]
      %v382 = vld [vmem:[%s3 + $0x90] sm:$0xff]
      %v383 = vld [vmem:[%s3 + $0x98] sm:$0xff]
      %v384 = vld [vmem:[%s3 + $0xa0] sm:$0xff]
      %v385 = vld [vmem:[%s3 + $0xa8] sm:$0xff]
      %v386 = vld [vmem:[%s3 + $0xb0] sm:$0xff]
      %v387 = vld [vmem:[%s3 + $0xb8] sm:$0xff]
      %v388 = vld [vmem:[%s3 + $0xc0] sm:$0xff]
      %v389 = vld [vmem:[%s3 + $0xc8] sm:$0xff]
      %v390 = vld [vmem:[%s3 + $0xd0] sm:$0xff]
      %v391 = vld [vmem:[%s3 + $0xd8] sm:$0xff]
      %v392 = vld [vmem:[%s3 + $0xe0] sm:$0xff]
      %v393 = vld [vmem:[%s3 + $0xe8] sm:$0xff]
      %v394 = vld [vmem:[%s3 + $0xf0] sm:$0xff]
      %v395 = vld [vmem:[%s3 + $0xf8] sm:$0xff]
      %v396 = vld [vmem:[%s3 + $0x100] sm:$0xff]
      %v397 = vld [vmem:[%s3 + $0x108] sm:$0xff]
      %v398 = vld [vmem:[%s3 + $0x110] sm:$0xff]
      %v399 = vld [vmem:[%s3 + $0x118] sm:$0xff]
      %v400 = vld [vmem:[%s3 + $0x120] sm:$0xff]
      %v401 = vld [vmem:[%s3 + $0x128] sm:$0xff]
      %v402 = vld [vmem:[%s3 + $0x130] sm:$0xff]
      %v403 = vld [vmem:[%s3 + $0x138] sm:$0xff]
      %v404 = vld [vmem:[%s3 + $0x140] sm:$0xff]
      %v405 = vld [vmem:[%s3 + $0x148] sm:$0xff]
      %v406 = vld [vmem:[%s3 + $0x150] sm:$0xff]
      %v407 = vld [vmem:[%s3 + $0x158] sm:$0xff]
      %v408 = vld [vmem:[%s3 + $0x160] sm:$0xff]
      %v409 = vld [vmem:[%s3 + $0x168] sm:$0xff]
      %v410 = vld [vmem:[%s3 + $0x170] sm:$0xff]
      %v411 = vld [vmem:[%s3 + $0x178] sm:$0xff]
      %v412 = vld [vmem:[%s3 + $0x180] sm:$0xff]
      %v413 = vld [vmem:[%s3 + $0x188] sm:$0xff]
      %v414 = vld [vmem:[%s3 + $0x190] sm:$0xff]
      %v415 = vld [vmem:[%s3 + $0x198] sm:$0xff]
      %v416 = vld [vmem:[%s3 + $0x1a0] sm:$0xff]
      %v417 = vld [vmem:[%s3 + $0x1a8] sm:$0xff]
      %v418 = vld [vmem:[%s3 + $0x1b0] sm:$0xff]
      %v419 = vld [vmem:[%s3 + $0x1b8] sm:$0xff]
      %v420 = vld [vmem:[%s3 + $0x1c0] sm:$0xff]
      %v421 = vld [vmem:[%s3 + $0x1c8] sm:$0xff]
      %v422 = vld [vmem:[%s3 + $0x1d0] sm:$0xff]
      %v423 = vld [vmem:[%s3 + $0x1d8] sm:$0xff]
      %v424 = vld [vmem:[%s3 + $0x1e0] sm:$0xff]
      %v425 = vld [vmem:[%s3 + $0x1e8] sm:$0xff]
      %v426 = vld [vmem:[%s3 + $0x1f0] sm:$0xff]
      %v427 = vld [vmem:[%s3 + $0x1f8] sm:$0xff]
      %v492 = vunpack.c.l.b16 %v364
      %v493 = vunpack.c.h.b16 %v364
      %v494 = vunpack.c.l.b16 %v365
      %v495 = vunpack.c.h.b16 %v365
      %v496 = vunpack.c.l.b16 %v366
      %v497 = vunpack.c.h.b16 %v366
      %v498 = vunpack.c.l.b16 %v367
      %v499 = vunpack.c.h.b16 %v367
      %v500 = vunpack.c.l.b16 %v368
      %v501 = vunpack.c.h.b16 %v368
      %v502 = vunpack.c.l.b16 %v369
      %v503 = vunpack.c.h.b16 %v369
      %v504 = vunpack.c.l.b16 %v370
      %v505 = vunpack.c.h.b16 %v370
      %v506 = vunpack.c.l.b16 %v371
      %v507 = vunpack.c.h.b16 %v371
      %v508 = vunpack.c.l.b16 %v372
      %v509 = vunpack.c.h.b16 %v372
      %v510 = vunpack.c.l.b16 %v373
      %v511 = vunpack.c.h.b16 %v373
      %v512 = vunpack.c.l.b16 %v374
      %v513 = vunpack.c.h.b16 %v374
      %v514 = vunpack.c.l.b16 %v375
      %v515 = vunpack.c.h.b16 %v375
      %v516 = vunpack.c.l.b16 %v376
      %v517 = vunpack.c.h.b16 %v376
      %v518 = vunpack.c.l.b16 %v377
      %v519 = vunpack.c.h.b16 %v377
      %v520 = vunpack.c.l.b16 %v378
      %v521 = vunpack.c.h.b16 %v378
      %v522 = vunpack.c.l.b16 %v379
      %v523 = vunpack.c.h.b16 %v379
      %v524 = vunpack.c.l.b16 %v380
      %v525 = vunpack.c.h.b16 %v380
      %v526 = vunpack.c.l.b16 %v381
      %v527 = vunpack.c.h.b16 %v381
      %v528 = vunpack.c.l.b16 %v382
      %v529 = vunpack.c.h.b16 %v382
      %v530 = vunpack.c.l.b16 %v383
      %v531 = vunpack.c.h.b16 %v383
      %v532 = vunpack.c.l.b16 %v384
      %v533 = vunpack.c.h.b16 %v384
      %v534 = vunpack.c.l.b16 %v385
      %v535 = vunpack.c.h.b16 %v385
      %v536 = vunpack.c.l.b16 %v386
      %v537 = vunpack.c.h.b16 %v386
      %v538 = vunpack.c.l.b16 %v387
      %v539 = vunpack.c.h.b16 %v387
      %v540 = vunpack.c.l.b16 %v388
      %v541 = vunpack.c.h.b16 %v388
      %v542 = vunpack.c.l.b16 %v389
      %v543 = vunpack.c.h.b16 %v389
      %v544 = vunpack.c.l.b16 %v390
      %v545 = vunpack.c.h.b16 %v390
      %v546 = vunpack.c.l.b16 %v391
      %v547 = vunpack.c.h.b16 %v391
      %v548 = vunpack.c.l.b16 %v392
      %v549 = vunpack.c.h.b16 %v392
      %v550 = vunpack.c.l.b16 %v393
      %v551 = vunpack.c.h.b16 %v393
      %v552 = vunpack.c.l.b16 %v394
      %v553 = vunpack.c.h.b16 %v394
      %v554 = vunpack.c.l.b16 %v395
      %v555 = vunpack.c.h.b16 %v395
      %v556 = vunpack.c.l.b16 %v396
      %v557 = vunpack.c.h.b16 %v396
      %v558 = vunpack.c.l.b16 %v397
      %v559 = vunpack.c.h.b16 %v397
      %v560 = vunpack.c.l.b16 %v398
      %v561 = vunpack.c.h.b16 %v398
      %v562 = vunpack.c.l.b16 %v399
      %v563 = vunpack.c.h.b16 %v399
      %v564 = vunpack.c.l.b16 %v400
      %v565 = vunpack.c.h.b16 %v400
      %v566 = vunpack.c.l.b16 %v401
      %v567 = vunpack.c.h.b16 %v401
      %v568 = vunpack.c.l.b16 %v402
      %v569 = vunpack.c.h.b16 %v402
      %v570 = vunpack.c.l.b16 %v403
      %v571 = vunpack.c.h.b16 %v403
      %v572 = vunpack.c.l.b16 %v404
      %v573 = vunpack.c.h.b16 %v404
      %v574 = vunpack.c.l.b16 %v405
      %v575 = vunpack.c.h.b16 %v405
      %v576 = vunpack.c.l.b16 %v406
      %v577 = vunpack.c.h.b16 %v406
      %v578 = vunpack.c.l.b16 %v407
      %v579 = vunpack.c.h.b16 %v407
      %v580 = vunpack.c.l.b16 %v408
      %v581 = vunpack.c.h.b16 %v408
      %v582 = vunpack.c.l.b16 %v409
      %v583 = vunpack.c.h.b16 %v409
      %v584 = vunpack.c.l.b16 %v410
      %v585 = vunpack.c.h.b16 %v410
      %v586 = vunpack.c.l.b16 %v411
      %v587 = vunpack.c.h.b16 %v411
      %v588 = vunpack.c.l.b16 %v412
      %v589 = vunpack.c.h.b16 %v412
      %v590 = vunpack.c.l.b16 %v413
      %v591 = vunpack.c.h.b16 %v413
      %v592 = vunpack.c.l.b16 %v414
      %v593 = vunpack.c.h.b16 %v414
      %v594 = vunpack.c.l.b16 %v415
      %v595 = vunpack.c.h.b16 %v415
      %v596 = vunpack.c.l.b16 %v416
      %v597 = vunpack.c.h.b16 %v416
      %v598 = vunpack.c.l.b16 %v417
      %v599 = vunpack.c.h.b16 %v417
      %v600 = vunpack.c.l.b16 %v418
      %v601 = vunpack.c.h.b16 %v418
      %v602 = vunpack.c.l.b16 %v419
      %v603 = vunpack.c.h.b16 %v419
      %v604 = vunpack.c.l.b16 %v420
      %v605 = vunpack.c.h.b16 %v420
      %v606 = vunpack.c.l.b16 %v421
      %v607 = vunpack.c.h.b16 %v421
      %v608 = vunpack.c.l.b16 %v422
      %v609 = vunpack.c.h.b16 %v422
      %v610 = vunpack.c.l.b16 %v423
      %v611 = vunpack.c.h.b16 %v423
      %v612 = vunpack.c.l.b16 %v424
      %v613 = vunpack.c.h.b16 %v424
      %v614 = vunpack.c.l.b16 %v425
      %v615 = vunpack.c.h.b16 %v425
      %v616 = vunpack.c.l.b16 %v426
      %v617 = vunpack.c.h.b16 %v426
      %v618 = vunpack.c.l.b16 %v427
      %v619 = vunpack.c.h.b16 %v427
      %v620 = vpack.c.b16 %v496, %v492
      %v621 = vpack.c.b16 %v497, %v493
      %v622 = vpack.c.b16 %v498, %v494
      %v623 = vpack.c.b16 %v499, %v495
      %v624 = vpack.c.b16 %v504, %v500
      %v625 = vpack.c.b16 %v505, %v501
      %v626 = vpack.c.b16 %v506, %v502
      %v627 = vpack.c.b16 %v507, %v503
      %v628 = vpack.c.b16 %v512, %v508
      %v629 = vpack.c.b16 %v513, %v509
      %v630 = vpack.c.b16 %v514, %v510
      %v631 = vpack.c.b16 %v515, %v511
      %v632 = vpack.c.b16 %v520, %v516
      %v633 = vpack.c.b16 %v521, %v517
      %v634 = vpack.c.b16 %v522, %v518
      %v635 = vpack.c.b16 %v523, %v519
      %v636 = vpack.c.b16 %v528, %v524
      %v637 = vpack.c.b16 %v529, %v525
      %v638 = vpack.c.b16 %v530, %v526
      %v639 = vpack.c.b16 %v531, %v527
      %v640 = vpack.c.b16 %v536, %v532
      %v641 = vpack.c.b16 %v537, %v533
      %v642 = vpack.c.b16 %v538, %v534
      %v643 = vpack.c.b16 %v539, %v535
      %v644 = vpack.c.b16 %v544, %v540
      %v645 = vpack.c.b16 %v545, %v541
      %v646 = vpack.c.b16 %v546, %v542
      %v647 = vpack.c.b16 %v547, %v543
      %v648 = vpack.c.b16 %v552, %v548
      %v649 = vpack.c.b16 %v553, %v549
      %v650 = vpack.c.b16 %v554, %v550
      %v651 = vpack.c.b16 %v555, %v551
      %v652 = vpack.c.b16 %v560, %v556
      %v653 = vpack.c.b16 %v561, %v557
      %v654 = vpack.c.b16 %v562, %v558
      %v655 = vpack.c.b16 %v563, %v559
      %v656 = vpack.c.b16 %v568, %v564
      %v657 = vpack.c.b16 %v569, %v565
      %v658 = vpack.c.b16 %v570, %v566
      %v659 = vpack.c.b16 %v571, %v567
      %v660 = vpack.c.b16 %v576, %v572
      %v661 = vpack.c.b16 %v577, %v573
      %v662 = vpack.c.b16 %v578, %v574
      %v663 = vpack.c.b16 %v579, %v575
      %v664 = vpack.c.b16 %v584, %v580
      %v665 = vpack.c.b16 %v585, %v581
      %v666 = vpack.c.b16 %v586, %v582
      %v667 = vpack.c.b16 %v587, %v583
      %v668 = vpack.c.b16 %v592, %v588
      %v669 = vpack.c.b16 %v593, %v589
      %v670 = vpack.c.b16 %v594, %v590
      %v671 = vpack.c.b16 %v595, %v591
      %v672 = vpack.c.b16 %v600, %v596
      %v673 = vpack.c.b16 %v601, %v597
      %v674 = vpack.c.b16 %v602, %v598
      %v675 = vpack.c.b16 %v603, %v599
      %v676 = vpack.c.b16 %v608, %v604
      %v677 = vpack.c.b16 %v609, %v605
      %v678 = vpack.c.b16 %v610, %v606
      %v679 = vpack.c.b16 %v611, %v607
      %v680 = vpack.c.b16 %v616, %v612
      %v681 = vpack.c.b16 %v617, %v613
      %v682 = vpack.c.b16 %v618, %v614
      %v683 = vpack.c.b16 %v619, %v615
      %748 = vmatprep.subr.bf16.mxu0 %v621
      %749 = vmatpush1.bf16.msra.mxu0 %v620
      %750 = vmatprep.subr.bf16.mxu0 %v625
      %751 = vmatpush1.bf16.msra.mxu0 %v624
      %752 = vmatprep.subr.bf16.mxu0 %v629
      %753 = vmatpush1.bf16.msra.mxu0 %v628
      %754 = vmatprep.subr.bf16.mxu0 %v633
      %755 = vmatpush1.bf16.msra.mxu0 %v632
      %756 = vmatprep.subr.bf16.mxu0 %v637
      %757 = vmatpush1.bf16.msra.mxu0 %v636
      %758 = vmatprep.subr.bf16.mxu0 %v641
      %759 = vmatpush1.bf16.msra.mxu0 %v640
      %760 = vmatprep.subr.bf16.mxu0 %v645
      %761 = vmatpush1.bf16.msra.mxu0 %v644
      %762 = vmatprep.subr.bf16.mxu0 %v649
      %763 = vmatpush1.bf16.msra.mxu0 %v648
      %764 = vmatprep.subr.bf16.mxu0 %v653
      %765 = vmatpush1.bf16.msra.mxu0 %v652
      %766 = vmatprep.subr.bf16.mxu0 %v657
      %767 = vmatpush1.bf16.msra.mxu0 %v656
      %768 = vmatprep.subr.bf16.mxu0 %v661
      %769 = vmatpush1.bf16.msra.mxu0 %v660
      %770 = vmatprep.subr.bf16.mxu0 %v665
      %771 = vmatpush1.bf16.msra.mxu0 %v664
      %772 = vmatprep.subr.bf16.mxu0 %v669
      %773 = vmatpush1.bf16.msra.mxu0 %v668
      %774 = vmatprep.subr.bf16.mxu0 %v673
      %775 = vmatpush1.bf16.msra.mxu0 %v672
      %776 = vmatprep.subr.bf16.mxu0 %v677
      %777 = vmatpush1.bf16.msra.mxu0 %v676
      %778 = vmatprep.subr.bf16.mxu0 %v681
      %779 = vmatpush1.bf16.msra.mxu0 %v680
      %780 = vmatprep.mubr.bf16.mxu0 %v363
      %781 = vmatmul.mubr.bf16.gmra.mrb[0].mxu0 %v362
      %v782 = vpop.f32.mrb[0].mxu0
      %v783 = vadd.f32 0.0, %v782
      %v784 = vpop.f32.mrb[0].mxu0
      %v785 = vadd.f32 0.0, %v784
      %v786 = vpop.f32.mrb[0].mxu0
      %v787 = vpop.f32.mrb[0].mxu0
      %788 = vdwg.mxu0
      %789 = vmatprep.subr.bf16.mxu0 %v623
      %790 = vmatpush1.bf16.msra.mxu0 %v622
      %791 = vmatprep.subr.bf16.mxu0 %v627
      %792 = vmatpush1.bf16.msra.mxu0 %v626
      %793 = vmatprep.subr.bf16.mxu0 %v631
      %794 = vmatpush1.bf16.msra.mxu0 %v630
      %795 = vmatprep.subr.bf16.mxu0 %v635
      %796 = vmatpush1.bf16.msra.mxu0 %v634
      %797 = vmatprep.subr.bf16.mxu0 %v639
      %798 = vmatpush1.bf16.msra.mxu0 %v638
      %799 = vmatprep.subr.bf16.mxu0 %v643
      %800 = vmatpush1.bf16.msra.mxu0 %v642
      %801 = vmatprep.subr.bf16.mxu0 %v647
      %802 = vmatpush1.bf16.msra.mxu0 %v646
      %803 = vmatprep.subr.bf16.mxu0 %v651
      %804 = vmatpush1.bf16.msra.mxu0 %v650
      %805 = vmatprep.subr.bf16.mxu0 %v655
      %806 = vmatpush1.bf16.msra.mxu0 %v654
      %807 = vmatprep.subr.bf16.mxu0 %v659
      %808 = vmatpush1.bf16.msra.mxu0 %v658
      %809 = vmatprep.subr.bf16.mxu0 %v663
      %810 = vmatpush1.bf16.msra.mxu0 %v662
      %811 = vmatprep.subr.bf16.mxu0 %v667
      %812 = vmatpush1.bf16.msra.mxu0 %v666
      %813 = vmatprep.subr.bf16.mxu0 %v671
      %814 = vmatpush1.bf16.msra.mxu0 %v670
      %815 = vmatprep.subr.bf16.mxu0 %v675
      %816 = vmatpush1.bf16.msra.mxu0 %v674
      %817 = vmatprep.subr.bf16.mxu0 %v679
      %818 = vmatpush1.bf16.msra.mxu0 %v678
      %819 = vmatprep.subr.bf16.mxu0 %v683
      %820 = vmatpush1.bf16.msra.mxu0 %v682
      %821 = vmatprep.mubr.bf16.mxu0 %v363
      %822 = vmatmul.mubr.bf16.gmra.mrb[0].mxu0 %v362
      %v823 = vpop.f32.mrb[0].mxu0
      %v824 = vadd.f32 0.0, %v823
      %v825 = vpop.f32.mrb[0].mxu0
      %v826 = vadd.f32 0.0, %v825
      %v827 = vpop.f32.mrb[0].mxu0
      %v828 = vpop.f32.mrb[0].mxu0
      %829 = vdwg.mxu0
      %v830 = vmul.f32 %v783, %v783
      %v831 = vmul.f32 %v785, %v785
      %v832 = vmul.f32 %v824, %v824
      %v833 = vmul.f32 %v826, %v826
      %v834 = vld [vmem:[%s346] sm:$0xf]
      %v836 = vlaneseq
      %v837 = vshrl.u32 %v836, 7
      %v838 = vsub.s32 0, %v837
      %v839 = vrot.slane %v834, %v838
      %v840 = vlaneseq
      %v841 = vshrl.u32 %v840, 7
      %v842 = vsub.s32 1, %v841
      %v843 = vrot.slane %v834, %v842
      %v844 = vlaneseq
      %v845 = vshrl.u32 %v844, 7
      %v846 = vsub.s32 2, %v845
      %v847 = vrot.slane %v834, %v846
      %v848 = vlaneseq
      %v849 = vshrl.u32 %v848, 7
      %v850 = vsub.s32 3, %v849
      %v851 = vrot.slane %v834, %v850
      %v856 = vmul.f32 %v830, %v839
      %v857 = vmul.f32 %v831, %v843
      %v858 = vmul.f32 %v832, %v847
      %v859 = vmul.f32 %v833, %v851
      %vm860 = vcmask 1042432
      %v861 = vsel %vm860, %v856, 0.0
      %v862 = vsel %vm860, %v857, 0.0
      %v863 = vadd.f32 %v861, %v862
      %v864 = vsel %vm860, %v858, 0.0
      %v865 = vadd.f32 %v863, %v864
      %v866 = vsel %vm860, %v859, 0.0
      %v867 = vadd.f32 %v865, %v866
      %868 = vadd.xlane.f32.xlu0 %v867
      %v869 = vpop.xlane.xlu0 %868
      %v870 = vsel %vm860, %v830, 0.0
      %v871 = vsel %vm860, %v831, 0.0
      %v872 = vadd.f32 %v870, %v871
      %v873 = vsel %vm860, %v832, 0.0
      %v874 = vadd.f32 %v872, %v873
      %v875 = vsel %vm860, %v833, 0.0
      %v876 = vadd.f32 %v874, %v875
      %877 = vadd.xlane.f32.xlu0 %v876
      %v878 = vpop.xlane.xlu0 %877
      %v879 = vsel %vm860, %v869, 0.0
      %v880 = vrot.slane %v879, 4
      %v881 = vadd.f32 %v879, %v880
      %v882 = vrot.slane %v881, 2
      %v883 = vadd.f32 %v881, %v882
      %v884 = vrot.slane %v883, 1
      %v885 = vadd.f32 %v883, %v884
      %vm886 = vcmask 0
      %887 = vst.msk [vmem:[%s349] sm:$0x1] %vm886, %v885
      %v888 = vsub.f32 %v878, %v869
      %v889 = vsel %vm860, %v888, 0.0
      %v890 = vrot.slane %v889, 4
      %v891 = vadd.f32 %v889, %v890
      %v892 = vrot.slane %v891, 2
      %v893 = vadd.f32 %v891, %v892
      %v894 = vrot.slane %v893, 1
      %v895 = vadd.f32 %v893, %v894
      %896 = vst.msk [vmem:[%s352] sm:$0x1] %vm886, %v895
      %v898 = vcombine.high %v356, %v356
      %v900 = vsel %vm860, %v356, 0.0
      %v901 = vsel %vm860, %v898, 0.0
      %v902 = vadd.f32 %v900, %v901
      %903 = vadd.xlane.f32.xlu0 %v902
      %v904 = vpop.xlane.xlu0 %903
      %v905 = vrcp.pop 256.0
      %v906 = vmul.f32 %v904, %v905
      %v907 = vld [vmem:[%s4] sm:$0x7]
      %v908 = vmul.f32 %v906, %v907
      %vm909 = vcmask 10240
      %v910 = vsel %vm909, %v908, 0.0
      %v911 = vrot.slane %v910, 4
      %v912 = vadd.f32 %v910, %v911
      %v913 = vrot.slane %v912, 2
      %v914 = vadd.f32 %v912, %v913
      %v915 = vrot.slane %v914, 1
      %v916 = vadd.f32 %v914, %v915
      %v917 = vld [vmem:[%s5] sm:$0x1]
      %v918 = vadd.f32 %v916, %v917
      %vm919 = vcmask 8192
      %920 = vst.msk [vmem:[%s355] sm:$0x1] %vm919, %v918
      %p921 = scmp.lt.s32.totalorder %s20, 1
      %s922 = scalar_select %p921, %s20, 1
      %s923 = scalar_lea.vmem %s6, %s922
      %p924 = scmp.lt.s32.totalorder %s20, 1
      %s925 = scalar_select %p924, %s20, 1
      %s926 = scalar_lea.vmem %s7, %s925
      %p927 = scmp.lt.s32.totalorder %s20, 1
      %s928 = scalar_select %p927, %s20, 1
      %s929 = scalar_lea.vmem %s8, %s928
      // Predicated region
      $region45: #{mfm_mask_forward.5} parent=43 // pred_check
        %p930 = pneg %p179
      $region46: #{mfm_mask_forward.5} parent=43 // pred_check_branch
        %932 = sbr.rel (%p930) target = $region48
      $region47: #{mfm_mask_forward.5} parent=43 // pred_region
        _
      $region48: #{mfm_mask_forward.5} parent=43 // pred_fallthru
        _
      // Predicated region
      $region49: #{mfm_mask_forward.5} parent=43 // pred_check
        %p933 = pneg %p205
      $region50: #{mfm_mask_forward.5} parent=43 // pred_check_branch
        %935 = sbr.rel (%p933) target = $region52
      $region51: #{mfm_mask_forward.5} parent=43 // pred_region
        _
      $region52: #{mfm_mask_forward.5} parent=43 // pred_fallthru
        _
      // Predicated region
      $region53: #{mfm_mask_forward.5} parent=43 // pred_check
        %p936 = pneg %p231
      $region54: #{mfm_mask_forward.5} parent=43 // pred_check_branch
        %938 = sbr.rel (%p936) target = $region56
      $region55: #{mfm_mask_forward.5} parent=43 // pred_region
        _
      $region56: #{mfm_mask_forward.5} parent=43 // pred_fallthru
        _
    $region44: #{mfm_mask_forward.5} parent=5 // pred_fallthru
      _
    %p939 = scmp.le.s32.totalorder 2, %s15
    // Predicated region
    $region57: #{mfm_mask_forward.5} parent=5 // pred_check
      %p940 = pneg %p939
    $region58: #{mfm_mask_forward.5} parent=5 // pred_check_branch
      %942 = sbr.rel (%p940) target = $region60
    $region59: #{mfm_mask_forward.5} parent=5 // pred_region
      %s943 = ssub.s32 %s15, 2
      // Predicated region
      $region61: #{mfm_mask_forward.5} parent=59 // pred_check
        %p944 = pneg %p185
      $region62: #{mfm_mask_forward.5} parent=59 // pred_check_branch
        %946 = sbr.rel (%p944) target = $region64
      $region63: #{mfm_mask_forward.5} parent=59 // pred_region
        %p947 = scmp.lt.s32.totalorder %s21, 1
        %s948 = scalar_select %p947, %s21, 1
        %s949 = scalar_lea.vmem %s6, %s948
      $region64: #{mfm_mask_forward.5} parent=59 // pred_fallthru
        _
      // Predicated region
      $region65: #{mfm_mask_forward.5} parent=59 // pred_check
        %p950 = pneg %p211
      $region66: #{mfm_mask_forward.5} parent=59 // pred_check_branch
        %952 = sbr.rel (%p950) target = $region68
      $region67: #{mfm_mask_forward.5} parent=59 // pred_region
        %p953 = scmp.lt.s32.totalorder %s21, 1
        %s954 = scalar_select %p953, %s21, 1
        %s955 = scalar_lea.vmem %s7, %s954
      $region68: #{mfm_mask_forward.5} parent=59 // pred_fallthru
        _
      // Predicated region
      $region69: #{mfm_mask_forward.5} parent=59 // pred_check
        %p956 = pneg %p237
      $region70: #{mfm_mask_forward.5} parent=59 // pred_check_branch
        %958 = sbr.rel (%p956) target = $region72
      $region71: #{mfm_mask_forward.5} parent=59 // pred_region
        %p959 = scmp.lt.s32.totalorder %s21, 1
        %s960 = scalar_select %p959, %s21, 1
        %s961 = scalar_lea.vmem %s8, %s960
      $region72: #{mfm_mask_forward.5} parent=59 // pred_fallthru
        _
    $region60: #{mfm_mask_forward.5} parent=5 // pred_fallthru
      _
  $region6: #{mfm_mask_forward.5} parent=0 // loop_footer
    %s19 = sadd.s32 1, %s15
  $region7: #{mfm_mask_forward.5} parent=0 // loop_footer_branch
    %14 = sbr.rel target = $region3
  $region8: #{mfm_mask_forward.5} parent=0 // loop_exit
    _

</llo_original>
